<compile_context>
chip_gen: v7x
topology: tpu7x:2x2x1
jax: 0.10.0
libtpu: 0.0.40
codegen_flags: <defaults>
</compile_context>

<pallas_src>
import jax
import jax.numpy as jnp
from jax.experimental import pallas as pl
from jax.experimental.pallas import tpu as pltpu

MAX_LEN = 24            # nn.LSTM hidden_size per direction
IN_FEAT = 20            # nn.LSTM input_size
HIDDEN = 64             # Linear hidden size
PAD_H = 128             # fused per-gate block: 4 streams x 24 = 96, padded to 128 lanes
N_GATES = 4             # i, f, g, o (PyTorch order)
GATE_W = N_GATES * PAD_H   # 512
BIAS_ROW = 4 * IN_FEAT     # lane 80 of the packed x slab carries a constant 1.0
MAX_TB = 256            # batch tile cap (fills the 256-wide MXU on v6e/v7x)


def _round_up(x, m):
    return -(-x // m) * m


def _tile_for_batch(B):
    """Pick (batch_tile, padded_batch).

    Prefer >=2 grid tiles (so both v7x TensorCores get work) while capping the tile at
    MAX_TB; tiny batches stay a single (sublane-aligned) tile.  v5e/v6e (1 TC) only pay
    ~0.35us extra per additional grid step, which is negligible for this kernel.
    """
    b8 = _round_up(B, 8)
    if b8 < 16:
        return b8, b8
    tb = min(MAX_TB, _round_up(b8 // 2, 8))
    return tb, _round_up(b8, tb)


def cdr3b_bilstm_kernel(x_ref, w_ref, w1_ref, b1_ref, w2t_ref, b2_ref, out_ref):
    # x_ref   : (T, TB, 128) bf16 -- lanes [0:40)=[pep|cdr](t), [40:80)=[pep|cdr](T-1-t),
    #                                lane 80 = 1.0 (bias lane), lanes [81:128) = 0
    # w_ref   : (256, 512)  bf16  -- fused [input | bias | recurrent] weights, gate-major:
    #                                gate k occupies lanes [128k, 128k+96), stream s the
    #                                sub-block [128k+24s, 128k+24s+24); rows 0:80 input,
    #                                row 80 bias, rows 128:224 recurrent, rest zero.
    # w1_ref  : (128, 64)   f32   -- Linear(96,64) weight (right-mul form), rows 96:128 zero
    # b1_ref  : (1, 64)     f32
    # w2t_ref : (1, 64)     f32   -- Linear(64,1) weight transposed
    # b2_ref  : (1, 1)      f32
    # out_ref : (1, 1, TB)  f32   -- lane-dense per-tile sigmoid outputs
    T, TB, _ = x_ref.shape
    w = w_ref[...]

    h = jnp.zeros((TB, PAD_H), jnp.float32)
    c = jnp.zeros((TB, PAD_H), jnp.float32)

    # Fully-unrolled recurrence: exactly ONE MXU matmul per step (K=256), with the
    # input projection and the bias folded into the same pass (bias via the 1.0 lane).
    for t in range(T):
        xh = jnp.concatenate([x_ref[t], h.astype(jnp.bfloat16)], axis=-1)   # (TB, 256)
        z = jnp.dot(xh, w, preferred_element_type=jnp.float32)              # (TB, 512)
        i_g = jax.nn.sigmoid(z[:, 0 * PAD_H:1 * PAD_H])
        f_g = jax.nn.sigmoid(z[:, 1 * PAD_H:2 * PAD_H])
        g_g = jnp.tanh(z[:, 2 * PAD_H:3 * PAD_H])
        o_g = jax.nn.sigmoid(z[:, 3 * PAD_H:4 * PAD_H])
        c = f_g * c + i_g * g_g
        h = o_g * jnp.tanh(c)
        # Padded gate lanes [96:128) of each gate block have zero weights AND zero bias,
        # so z is exactly 0 there -> g=tanh(0)=0 and c starts at 0, keeping the padded
        # lanes of h/c exactly 0 for every step (required by the block-diagonal whh).

    # h lanes [0:96] == [pep_f | cdr_f | pep_b | cdr_b] -- exactly the torch concat
    # order -- so the Linear(96,64) head is one matmul with the zero-padded weight.
    hid = jnp.maximum(
        jnp.dot(h, w1_ref[...], preferred_element_type=jnp.float32) + b1_ref[...],
        0.0)                                                                # (TB, 64)
    # Final 64->1 projection as a transposed matmul so the result is a lane-dense
    # (1, TB) row (one unmasked store) instead of a (TB, 1) column of masked stores.
    logit = jnp.dot(w2t_ref[...], hid.T,
                    preferred_element_type=jnp.float32) + b2_ref[...]       # (1, TB)
    out_ref[...] = jax.nn.sigmoid(logit).reshape(1, 1, TB)


def init_params(key):
    """Deterministic parameter init (shapes/semantics match the PyTorch module)."""
    ks = jax.random.split(key, 8)
    k_lstm = 1.0 / jnp.sqrt(MAX_LEN)
    k_lin1 = 1.0 / jnp.sqrt(MAX_LEN * 2 * 2)
    k_lin2 = 1.0 / jnp.sqrt(HIDDEN)
    u = lambda k, shape, b: jax.random.uniform(k, shape, jnp.float32, -b, b)
    # LSTM weights: 2 directions x 4 gates (i, f, g, o), pre-transposed (right-mul form).
    wih = u(ks[0], (2, N_GATES, IN_FEAT, MAX_LEN), k_lstm)
    whh = u(ks[1], (2, N_GATES, MAX_LEN, MAX_LEN), k_lstm)
    b = (u(ks[2], (2, N_GATES, 1, MAX_LEN), k_lstm)
         + u(ks[3], (2, N_GATES, 1, MAX_LEN), k_lstm))          # b_ih + b_hh
    # Linear(96, 64) split into 4 row-blocks of 24 ordered [pep_f, cdr_f, pep_b, cdr_b];
    # Linear(64, 1).
    w1 = u(ks[4], (4, MAX_LEN, HIDDEN), k_lin1)
    b1 = u(ks[5], (1, HIDDEN), k_lin1)
    w2 = u(ks[6], (HIDDEN, 1), k_lin2)
    b2 = u(ks[7], (1, 1), k_lin2)
    return (wih, whh, b, w1, b1, w2, b2)


def pack_params(params):
    """Fuse per-direction/per-gate weights into one padded, gate-major (256, 512) slab.

    Streams: 0 = pep_fwd, 1 = cdr_fwd, 2 = pep_bwd, 3 = cdr_bwd.
    Rows 0:80  : input weights (stream s's features at rows [20s, 20s+20)).
    Row  80    : combined bias (b_ih + b_hh), injected via the constant-1.0 input lane.
    Rows 128:224: block-diagonal recurrent weights (stream s at rows [128+24s, 128+24s+24)).
    Columns    : gate k occupies [128k, 128k+96); lanes [128k+96, 128k+128) stay ZERO
                 (weights and bias) so the padded lanes of h/c remain exactly 0.
    Call once (outside the per-call forward path) -- it is ~32 scatter updates.
    """
    wih, whh, b, w1, b1, w2, b2 = params
    H = MAX_LEN
    w = jnp.zeros((2 * PAD_H, GATE_W), jnp.float32)
    for k in range(N_GATES):
        for s in range(4):
            d = 0 if s < 2 else 1            # LSTM direction feeding this stream
            col = k * PAD_H + s * H
            in_row = s * IN_FEAT
            w = w.at[in_row:in_row + IN_FEAT, col:col + H].set(wih[d, k])
            w = w.at[BIAS_ROW, col:col + H].set(b[d, k, 0])
            w = w.at[PAD_H + s * H:PAD_H + (s + 1) * H, col:col + H].set(whh[d, k])
    w1p = jnp.zeros((PAD_H, HIDDEN), jnp.float32)
    w1p = w1p.at[0:4 * H, :].set(w1.reshape(4 * H, HIDDEN))
    w2t = jnp.transpose(w2)                  # (1, 64)
    return (w.astype(jnp.bfloat16), w1p, b1, w2t, b2)


@jax.jit
def cdr3b_bilstm_forward(pep, cdr3b, packed):
    """pep, cdr3b: (B, T, 20) batch-first, like the PyTorch module. Returns (B, 1)."""
    w, w1p, b1, w2t, b2 = packed
    B, T, F = pep.shape
    assert F == IN_FEAT and cdr3b.shape == (B, T, F)

    # Time-major, lane-dense input slab: x_pair[t] = [pep(t)|cdr(t)|pep(T-1-t)|cdr(T-1-t)],
    # lane 80 = 1.0 (drives the bias row of the fused weight), lanes 81:128 = 0, bf16.
    x = jnp.concatenate([pep, cdr3b], axis=-1)                # (B, T, 40)
    x = jnp.transpose(x, (1, 0, 2))                           # (T, B, 40)
    x_pair = jnp.concatenate([x, x[::-1]], axis=-1)           # (T, B, 80)
    pad = jnp.zeros((T, B, PAD_H - 4 * IN_FEAT), x.dtype)
    pad = pad.at[:, :, 0].set(1.0)                            # bias lane (lane 80)
    x_slab = jnp.concatenate([x_pair, pad], axis=-1).astype(jnp.bfloat16)   # (T, B, 128)

    tb, b_pad = _tile_for_batch(B)
    if b_pad != B:
        x_slab = jnp.pad(x_slab, ((0, 0), (0, b_pad - B), (0, 0)))
    n_tiles = b_pad // tb

    full = lambda a: pl.BlockSpec(a.shape, lambda i: (0,) * a.ndim)
    out = pl.pallas_call(
        cdr3b_bilstm_kernel,
        out_shape=jax.ShapeDtypeStruct((n_tiles, 1, tb), jnp.float32),
        grid=(n_tiles,),
        in_specs=[pl.BlockSpec((T, tb, PAD_H), lambda i: (0, i, 0)),
                  full(w), full(w1p), full(b1), full(w2t), full(b2)],
        out_specs=pl.BlockSpec((1, 1, tb), lambda i: (i, 0, 0)),
        compiler_params=pltpu.CompilerParams(
            dimension_semantics=("parallel",)),
    )(x_slab, w, w1p, b1, w2t, b2)
    return out.reshape(b_pad, 1)[:B]


def reference_forward(pep, cdr3b, params):
    """Pure-JAX f32 reference implementing the PyTorch math (for correctness check)."""
    wih, whh, b, w1, b1, w2, b2 = params

    def lstm_dir(x, d):
        B, T, _ = x.shape
        h = jnp.zeros((B, MAX_LEN), jnp.float32)
        c = jnp.zeros((B, MAX_LEN), jnp.float32)
        ts = range(T) if d == 0 else range(T - 1, -1, -1)
        for t in ts:
            x_t = x[:, t, :]
            g = [x_t @ wih[d, k] + h @ whh[d, k] + b[d, k] for k in range(4)]
            i_g = jax.nn.sigmoid(g[0]); f_g = jax.nn.sigmoid(g[1])
            g_g = jnp.tanh(g[2]); o_g = jax.nn.sigmoid(g[3])
            c = f_g * c + i_g * g_g
            h = o_g * jnp.tanh(c)
        return h

    h_pep_f, h_pep_b = lstm_dir(pep, 0), lstm_dir(pep, 1)
    h_cdr_f, h_cdr_b = lstm_dir(cdr3b, 0), lstm_dir(cdr3b, 1)
    hid = (h_pep_f @ w1[0] + h_cdr_f @ w1[1] + h_pep_b @ w1[2] + h_cdr_b @ w1[3] + b1)
    hid = jnp.maximum(hid, 0.0)
    return jax.nn.sigmoid(hid @ w2 + b2)


if __name__ == "__main__":
    key = jax.random.PRNGKey(0)
    kp, kc, kw = jax.random.split(key, 3)
    B, T = 2, 8
    pep = jax.random.normal(kp, (B, T, IN_FEAT), jnp.float32)
    cdr3b = jax.random.normal(kc, (B, T, IN_FEAT), jnp.float32)
    params = init_params(kw)
    packed = pack_params(params)          # packed once, outside the per-call path

    out = jax.block_until_ready(cdr3b_bilstm_forward(pep, cdr3b, packed))
    ref = reference_forward(pep, cdr3b, params)
    assert out.shape == (B, 1), out.shape
    # Kernel runs the MXU in bf16 (f32 accumulation); reference is pure f32.
    assert jnp.allclose(out, ref, atol=2e-2, rtol=0.0), (out, ref)

    # Also exercise the multi-tile (grid > 1) path with batch padding.
    B2 = 20
    pep2 = jax.random.normal(jax.random.PRNGKey(1), (B2, T, IN_FEAT), jnp.float32)
    cdr2 = jax.random.normal(jax.random.PRNGKey(2), (B2, T, IN_FEAT), jnp.float32)
    out2 = jax.block_until_ready(cdr3b_bilstm_forward(pep2, cdr2, packed))
    ref2 = reference_forward(pep2, cdr2, params)
    assert out2.shape == (B2, 1), out2.shape
    assert jnp.allclose(out2, ref2, atol=2e-2, rtol=0.0), (out2, ref2)

    print("KERNEL_OK")
</pallas_src>

<mosaic_0001>
module attributes {stable_mosaic.version = 11 : i64} {
  func.func @cdr3b_bilstm_kernel(%arg0: i32, %arg1: memref<8x8x128xbf16, #tpu.memory_space<vmem>>, %arg2: memref<256x512xbf16, #tpu.memory_space<vmem>>, %arg3: memref<128x64xf32, #tpu.memory_space<vmem>>, %arg4: memref<1x64xf32, #tpu.memory_space<vmem>>, %arg5: memref<1x64xf32, #tpu.memory_space<vmem>>, %arg6: memref<1x1xf32, #tpu.memory_space<vmem>>, %arg7: memref<1x1x8xf32, #tpu.memory_space<vmem>>) attributes {dimension_semantics = [#tpu.dimension_semantics<parallel>], iteration_bounds = array<i64: 1>, scalar_prefetch = 0 : i64, scratch_operands = 0 : i64, tpu.core_type = #tpu.core_type<tc>, window_params = [{transform_indices = @transform_0, window_bounds = array<i64: 8, 8, 128>}, {pipeline_mode = #tpu.pipeline_mode<synchronous>, transform_indices = @transform_1, window_bounds = array<i64: 256, 512>}, {pipeline_mode = #tpu.pipeline_mode<synchronous>, transform_indices = @transform_2, window_bounds = array<i64: 128, 64>}, {pipeline_mode = #tpu.pipeline_mode<synchronous>, transform_indices = @transform_3, window_bounds = array<i64: 1, 64>}, {pipeline_mode = #tpu.pipeline_mode<synchronous>, transform_indices = @transform_4, window_bounds = array<i64: 1, 64>}, {pipeline_mode = #tpu.pipeline_mode<synchronous>, transform_indices = @transform_5, window_bounds = array<i64: 1, 1>}, {transform_indices = @transform_6, window_bounds = array<i64: 1, 1, 8>}]} {
    %c0 = arith.constant 0 : index
    %c0_0 = arith.constant 0 : index
    %0 = vector.load %arg2[%c0, %c0_0] : memref<256x512xbf16, #tpu.memory_space<vmem>>, vector<256x512xbf16>
    %cst = arith.constant 0.000000e+00 : f32
    %1 = vector.broadcast %cst : f32 to vector<8x128xf32>
    %cst_1 = arith.constant 0.000000e+00 : f32
    %2 = vector.broadcast %cst_1 : f32 to vector<8x128xf32>
    %c0_2 = arith.constant 0 : index
    %c0_3 = arith.constant 0 : index
    %c0_4 = arith.constant 0 : index
    %3 = vector.load %arg1[%c0_2, %c0_3, %c0_4] : memref<8x8x128xbf16, #tpu.memory_space<vmem>>, vector<1x8x128xbf16>
    %4 = vector.shape_cast %3 : vector<1x8x128xbf16> to vector<8x128xbf16>
    %5 = arith.truncf %1 : vector<8x128xf32> to vector<8x128xbf16>
    %6 = tpu.concatenate %4, %5 in 1 : vector<8x128xbf16>, vector<8x128xbf16> -> vector<8x256xbf16>
    %cst_5 = arith.constant dense<0.000000e+00> : vector<8x512xf32>
    %7 = tpu.matmul %6, %0, %cst_5 {dimension_numbers = #tpu.dot_dimension_numbers<[1], [0], [0], [1], [0, 0, 1, 1], [], []>} : vector<8x256xbf16>, vector<256x512xbf16>, vector<8x512xf32> -> vector<8x512xf32>
    %8 = vector.extract_strided_slice %7 {offsets = [0, 0], sizes = [8, 128], strides = [1, 1]} : vector<8x512xf32> to vector<8x128xf32>
    %9 = arith.negf %8 : vector<8x128xf32>
    %10 = math.exp %9 : vector<8x128xf32>
    %cst_6 = arith.constant 1.000000e+00 : f32
    %11 = vector.broadcast %cst_6 : f32 to vector<8x128xf32>
    %12 = arith.addf %11, %10 : vector<8x128xf32>
    %13 = arith.divf %11, %12 : vector<8x128xf32>
    %14 = vector.extract_strided_slice %7 {offsets = [0, 128], sizes = [8, 128], strides = [1, 1]} : vector<8x512xf32> to vector<8x128xf32>
    %15 = arith.negf %14 : vector<8x128xf32>
    %16 = math.exp %15 : vector<8x128xf32>
    %cst_7 = arith.constant 1.000000e+00 : f32
    %17 = vector.broadcast %cst_7 : f32 to vector<8x128xf32>
    %18 = arith.addf %17, %16 : vector<8x128xf32>
    %19 = arith.divf %17, %18 : vector<8x128xf32>
    %20 = vector.extract_strided_slice %7 {offsets = [0, 256], sizes = [8, 128], strides = [1, 1]} : vector<8x512xf32> to vector<8x128xf32>
    %21 = math.tanh %20 : vector<8x128xf32>
    %22 = vector.extract_strided_slice %7 {offsets = [0, 384], sizes = [8, 128], strides = [1, 1]} : vector<8x512xf32> to vector<8x128xf32>
    %23 = arith.negf %22 : vector<8x128xf32>
    %24 = math.exp %23 : vector<8x128xf32>
    %cst_8 = arith.constant 1.000000e+00 : f32
    %25 = vector.broadcast %cst_8 : f32 to vector<8x128xf32>
    %26 = arith.addf %25, %24 : vector<8x128xf32>
    %27 = arith.divf %25, %26 : vector<8x128xf32>
    %28 = arith.mulf %19, %2 : vector<8x128xf32>
    %29 = arith.mulf %13, %21 : vector<8x128xf32>
    %30 = arith.addf %28, %29 : vector<8x128xf32>
    %31 = math.tanh %30 : vector<8x128xf32>
    %32 = arith.mulf %27, %31 : vector<8x128xf32>
    %c1 = arith.constant 1 : index
    %c0_9 = arith.constant 0 : index
    %c0_10 = arith.constant 0 : index
    %33 = vector.load %arg1[%c1, %c0_9, %c0_10] : memref<8x8x128xbf16, #tpu.memory_space<vmem>>, vector<1x8x128xbf16>
    %34 = vector.shape_cast %33 : vector<1x8x128xbf16> to vector<8x128xbf16>
    %35 = arith.truncf %32 : vector<8x128xf32> to vector<8x128xbf16>
    %36 = tpu.concatenate %34, %35 in 1 : vector<8x128xbf16>, vector<8x128xbf16> -> vector<8x256xbf16>
    %cst_11 = arith.constant dense<0.000000e+00> : vector<8x512xf32>
    %37 = tpu.matmul %36, %0, %cst_11 {dimension_numbers = #tpu.dot_dimension_numbers<[1], [0], [0], [1], [0, 0, 1, 1], [], []>} : vector<8x256xbf16>, vector<256x512xbf16>, vector<8x512xf32> -> vector<8x512xf32>
    %38 = vector.extract_strided_slice %37 {offsets = [0, 0], sizes = [8, 128], strides = [1, 1]} : vector<8x512xf32> to vector<8x128xf32>
    %39 = arith.negf %38 : vector<8x128xf32>
    %40 = math.exp %39 : vector<8x128xf32>
    %cst_12 = arith.constant 1.000000e+00 : f32
    %41 = vector.broadcast %cst_12 : f32 to vector<8x128xf32>
    %42 = arith.addf %41, %40 : vector<8x128xf32>
    %43 = arith.divf %41, %42 : vector<8x128xf32>
    %44 = vector.extract_strided_slice %37 {offsets = [0, 128], sizes = [8, 128], strides = [1, 1]} : vector<8x512xf32> to vector<8x128xf32>
    %45 = arith.negf %44 : vector<8x128xf32>
    %46 = math.exp %45 : vector<8x128xf32>
    %cst_13 = arith.constant 1.000000e+00 : f32
    %47 = vector.broadcast %cst_13 : f32 to vector<8x128xf32>
    %48 = arith.addf %47, %46 : vector<8x128xf32>
    %49 = arith.divf %47, %48 : vector<8x128xf32>
    %50 = vector.extract_strided_slice %37 {offsets = [0, 256], sizes = [8, 128], strides = [1, 1]} : vector<8x512xf32> to vector<8x128xf32>
    %51 = math.tanh %50 : vector<8x128xf32>
    %52 = vector.extract_strided_slice %37 {offsets = [0, 384], sizes = [8, 128], strides = [1, 1]} : vector<8x512xf32> to vector<8x128xf32>
    %53 = arith.negf %52 : vector<8x128xf32>
    %54 = math.exp %53 : vector<8x128xf32>
    %cst_14 = arith.constant 1.000000e+00 : f32
    %55 = vector.broadcast %cst_14 : f32 to vector<8x128xf32>
    %56 = arith.addf %55, %54 : vector<8x128xf32>
    %57 = arith.divf %55, %56 : vector<8x128xf32>
    %58 = arith.mulf %49, %30 : vector<8x128xf32>
    %59 = arith.mulf %43, %51 : vector<8x128xf32>
    %60 = arith.addf %58, %59 : vector<8x128xf32>
    %61 = math.tanh %60 : vector<8x128xf32>
    %62 = arith.mulf %57, %61 : vector<8x128xf32>
    %c2 = arith.constant 2 : index
    %c0_15 = arith.constant 0 : index
    %c0_16 = arith.constant 0 : index
    %63 = vector.load %arg1[%c2, %c0_15, %c0_16] : memref<8x8x128xbf16, #tpu.memory_space<vmem>>, vector<1x8x128xbf16>
    %64 = vector.shape_cast %63 : vector<1x8x128xbf16> to vector<8x128xbf16>
    %65 = arith.truncf %62 : vector<8x128xf32> to vector<8x128xbf16>
    %66 = tpu.concatenate %64, %65 in 1 : vector<8x128xbf16>, vector<8x128xbf16> -> vector<8x256xbf16>
    %cst_17 = arith.constant dense<0.000000e+00> : vector<8x512xf32>
    %67 = tpu.matmul %66, %0, %cst_17 {dimension_numbers = #tpu.dot_dimension_numbers<[1], [0], [0], [1], [0, 0, 1, 1], [], []>} : vector<8x256xbf16>, vector<256x512xbf16>, vector<8x512xf32> -> vector<8x512xf32>
    %68 = vector.extract_strided_slice %67 {offsets = [0, 0], sizes = [8, 128], strides = [1, 1]} : vector<8x512xf32> to vector<8x128xf32>
    %69 = arith.negf %68 : vector<8x128xf32>
    %70 = math.exp %69 : vector<8x128xf32>
    %cst_18 = arith.constant 1.000000e+00 : f32
    %71 = vector.broadcast %cst_18 : f32 to vector<8x128xf32>
    %72 = arith.addf %71, %70 : vector<8x128xf32>
    %73 = arith.divf %71, %72 : vector<8x128xf32>
    %74 = vector.extract_strided_slice %67 {offsets = [0, 128], sizes = [8, 128], strides = [1, 1]} : vector<8x512xf32> to vector<8x128xf32>
    %75 = arith.negf %74 : vector<8x128xf32>
    %76 = math.exp %75 : vector<8x128xf32>
    %cst_19 = arith.constant 1.000000e+00 : f32
    %77 = vector.broadcast %cst_19 : f32 to vector<8x128xf32>
    %78 = arith.addf %77, %76 : vector<8x128xf32>
    %79 = arith.divf %77, %78 : vector<8x128xf32>
    %80 = vector.extract_strided_slice %67 {offsets = [0, 256], sizes = [8, 128], strides = [1, 1]} : vector<8x512xf32> to vector<8x128xf32>
    %81 = math.tanh %80 : vector<8x128xf32>
    %82 = vector.extract_strided_slice %67 {offsets = [0, 384], sizes = [8, 128], strides = [1, 1]} : vector<8x512xf32> to vector<8x128xf32>
    %83 = arith.negf %82 : vector<8x128xf32>
    %84 = math.exp %83 : vector<8x128xf32>
    %cst_20 = arith.constant 1.000000e+00 : f32
    %85 = vector.broadcast %cst_20 : f32 to vector<8x128xf32>
    %86 = arith.addf %85, %84 : vector<8x128xf32>
    %87 = arith.divf %85, %86 : vector<8x128xf32>
    %88 = arith.mulf %79, %60 : vector<8x128xf32>
    %89 = arith.mulf %73, %81 : vector<8x128xf32>
    %90 = arith.addf %88, %89 : vector<8x128xf32>
    %91 = math.tanh %90 : vector<8x128xf32>
    %92 = arith.mulf %87, %91 : vector<8x128xf32>
    %c3 = arith.constant 3 : index
    %c0_21 = arith.constant 0 : index
    %c0_22 = arith.constant 0 : index
    %93 = vector.load %arg1[%c3, %c0_21, %c0_22] : memref<8x8x128xbf16, #tpu.memory_space<vmem>>, vector<1x8x128xbf16>
    %94 = vector.shape_cast %93 : vector<1x8x128xbf16> to vector<8x128xbf16>
    %95 = arith.truncf %92 : vector<8x128xf32> to vector<8x128xbf16>
    %96 = tpu.concatenate %94, %95 in 1 : vector<8x128xbf16>, vector<8x128xbf16> -> vector<8x256xbf16>
    %cst_23 = arith.constant dense<0.000000e+00> : vector<8x512xf32>
    %97 = tpu.matmul %96, %0, %cst_23 {dimension_numbers = #tpu.dot_dimension_numbers<[1], [0], [0], [1], [0, 0, 1, 1], [], []>} : vector<8x256xbf16>, vector<256x512xbf16>, vector<8x512xf32> -> vector<8x512xf32>
    %98 = vector.extract_strided_slice %97 {offsets = [0, 0], sizes = [8, 128], strides = [1, 1]} : vector<8x512xf32> to vector<8x128xf32>
    %99 = arith.negf %98 : vector<8x128xf32>
    %100 = math.exp %99 : vector<8x128xf32>
    %cst_24 = arith.constant 1.000000e+00 : f32
    %101 = vector.broadcast %cst_24 : f32 to vector<8x128xf32>
    %102 = arith.addf %101, %100 : vector<8x128xf32>
    %103 = arith.divf %101, %102 : vector<8x128xf32>
    %104 = vector.extract_strided_slice %97 {offsets = [0, 128], sizes = [8, 128], strides = [1, 1]} : vector<8x512xf32> to vector<8x128xf32>
    %105 = arith.negf %104 : vector<8x128xf32>
    %106 = math.exp %105 : vector<8x128xf32>
    %cst_25 = arith.constant 1.000000e+00 : f32
    %107 = vector.broadcast %cst_25 : f32 to vector<8x128xf32>
    %108 = arith.addf %107, %106 : vector<8x128xf32>
    %109 = arith.divf %107, %108 : vector<8x128xf32>
    %110 = vector.extract_strided_slice %97 {offsets = [0, 256], sizes = [8, 128], strides = [1, 1]} : vector<8x512xf32> to vector<8x128xf32>
    %111 = math.tanh %110 : vector<8x128xf32>
    %112 = vector.extract_strided_slice %97 {offsets = [0, 384], sizes = [8, 128], strides = [1, 1]} : vector<8x512xf32> to vector<8x128xf32>
    %113 = arith.negf %112 : vector<8x128xf32>
    %114 = math.exp %113 : vector<8x128xf32>
    %cst_26 = arith.constant 1.000000e+00 : f32
    %115 = vector.broadcast %cst_26 : f32 to vector<8x128xf32>
    %116 = arith.addf %115, %114 : vector<8x128xf32>
    %117 = arith.divf %115, %116 : vector<8x128xf32>
    %118 = arith.mulf %109, %90 : vector<8x128xf32>
    %119 = arith.mulf %103, %111 : vector<8x128xf32>
    %120 = arith.addf %118, %119 : vector<8x128xf32>
    %121 = math.tanh %120 : vector<8x128xf32>
    %122 = arith.mulf %117, %121 : vector<8x128xf32>
    %c4 = arith.constant 4 : index
    %c0_27 = arith.constant 0 : index
    %c0_28 = arith.constant 0 : index
    %123 = vector.load %arg1[%c4, %c0_27, %c0_28] : memref<8x8x128xbf16, #tpu.memory_space<vmem>>, vector<1x8x128xbf16>
    %124 = vector.shape_cast %123 : vector<1x8x128xbf16> to vector<8x128xbf16>
    %125 = arith.truncf %122 : vector<8x128xf32> to vector<8x128xbf16>
    %126 = tpu.concatenate %124, %125 in 1 : vector<8x128xbf16>, vector<8x128xbf16> -> vector<8x256xbf16>
    %cst_29 = arith.constant dense<0.000000e+00> : vector<8x512xf32>
    %127 = tpu.matmul %126, %0, %cst_29 {dimension_numbers = #tpu.dot_dimension_numbers<[1], [0], [0], [1], [0, 0, 1, 1], [], []>} : vector<8x256xbf16>, vector<256x512xbf16>, vector<8x512xf32> -> vector<8x512xf32>
    %128 = vector.extract_strided_slice %127 {offsets = [0, 0], sizes = [8, 128], strides = [1, 1]} : vector<8x512xf32> to vector<8x128xf32>
    %129 = arith.negf %128 : vector<8x128xf32>
    %130 = math.exp %129 : vector<8x128xf32>
    %cst_30 = arith.constant 1.000000e+00 : f32
    %131 = vector.broadcast %cst_30 : f32 to vector<8x128xf32>
    %132 = arith.addf %131, %130 : vector<8x128xf32>
    %133 = arith.divf %131, %132 : vector<8x128xf32>
    %134 = vector.extract_strided_slice %127 {offsets = [0, 128], sizes = [8, 128], strides = [1, 1]} : vector<8x512xf32> to vector<8x128xf32>
    %135 = arith.negf %134 : vector<8x128xf32>
    %136 = math.exp %135 : vector<8x128xf32>
    %cst_31 = arith.constant 1.000000e+00 : f32
    %137 = vector.broadcast %cst_31 : f32 to vector<8x128xf32>
    %138 = arith.addf %137, %136 : vector<8x128xf32>
    %139 = arith.divf %137, %138 : vector<8x128xf32>
    %140 = vector.extract_strided_slice %127 {offsets = [0, 256], sizes = [8, 128], strides = [1, 1]} : vector<8x512xf32> to vector<8x128xf32>
    %141 = math.tanh %140 : vector<8x128xf32>
    %142 = vector.extract_strided_slice %127 {offsets = [0, 384], sizes = [8, 128], strides = [1, 1]} : vector<8x512xf32> to vector<8x128xf32>
    %143 = arith.negf %142 : vector<8x128xf32>
    %144 = math.exp %143 : vector<8x128xf32>
    %cst_32 = arith.constant 1.000000e+00 : f32
    %145 = vector.broadcast %cst_32 : f32 to vector<8x128xf32>
    %146 = arith.addf %145, %144 : vector<8x128xf32>
    %147 = arith.divf %145, %146 : vector<8x128xf32>
    %148 = arith.mulf %139, %120 : vector<8x128xf32>
    %149 = arith.mulf %133, %141 : vector<8x128xf32>
    %150 = arith.addf %148, %149 : vector<8x128xf32>
    %151 = math.tanh %150 : vector<8x128xf32>
    %152 = arith.mulf %147, %151 : vector<8x128xf32>
    %c5 = arith.constant 5 : index
    %c0_33 = arith.constant 0 : index
    %c0_34 = arith.constant 0 : index
    %153 = vector.load %arg1[%c5, %c0_33, %c0_34] : memref<8x8x128xbf16, #tpu.memory_space<vmem>>, vector<1x8x128xbf16>
    %154 = vector.shape_cast %153 : vector<1x8x128xbf16> to vector<8x128xbf16>
    %155 = arith.truncf %152 : vector<8x128xf32> to vector<8x128xbf16>
    %156 = tpu.concatenate %154, %155 in 1 : vector<8x128xbf16>, vector<8x128xbf16> -> vector<8x256xbf16>
    %cst_35 = arith.constant dense<0.000000e+00> : vector<8x512xf32>
    %157 = tpu.matmul %156, %0, %cst_35 {dimension_numbers = #tpu.dot_dimension_numbers<[1], [0], [0], [1], [0, 0, 1, 1], [], []>} : vector<8x256xbf16>, vector<256x512xbf16>, vector<8x512xf32> -> vector<8x512xf32>
    %158 = vector.extract_strided_slice %157 {offsets = [0, 0], sizes = [8, 128], strides = [1, 1]} : vector<8x512xf32> to vector<8x128xf32>
    %159 = arith.negf %158 : vector<8x128xf32>
    %160 = math.exp %159 : vector<8x128xf32>
    %cst_36 = arith.constant 1.000000e+00 : f32
    %161 = vector.broadcast %cst_36 : f32 to vector<8x128xf32>
    %162 = arith.addf %161, %160 : vector<8x128xf32>
    %163 = arith.divf %161, %162 : vector<8x128xf32>
    %164 = vector.extract_strided_slice %157 {offsets = [0, 128], sizes = [8, 128], strides = [1, 1]} : vector<8x512xf32> to vector<8x128xf32>
    %165 = arith.negf %164 : vector<8x128xf32>
    %166 = math.exp %165 : vector<8x128xf32>
    %cst_37 = arith.constant 1.000000e+00 : f32
    %167 = vector.broadcast %cst_37 : f32 to vector<8x128xf32>
    %168 = arith.addf %167, %166 : vector<8x128xf32>
    %169 = arith.divf %167, %168 : vector<8x128xf32>
    %170 = vector.extract_strided_slice %157 {offsets = [0, 256], sizes = [8, 128], strides = [1, 1]} : vector<8x512xf32> to vector<8x128xf32>
    %171 = math.tanh %170 : vector<8x128xf32>
    %172 = vector.extract_strided_slice %157 {offsets = [0, 384], sizes = [8, 128], strides = [1, 1]} : vector<8x512xf32> to vector<8x128xf32>
    %173 = arith.negf %172 : vector<8x128xf32>
    %174 = math.exp %173 : vector<8x128xf32>
    %cst_38 = arith.constant 1.000000e+00 : f32
    %175 = vector.broadcast %cst_38 : f32 to vector<8x128xf32>
    %176 = arith.addf %175, %174 : vector<8x128xf32>
    %177 = arith.divf %175, %176 : vector<8x128xf32>
    %178 = arith.mulf %169, %150 : vector<8x128xf32>
    %179 = arith.mulf %163, %171 : vector<8x128xf32>
    %180 = arith.addf %178, %179 : vector<8x128xf32>
    %181 = math.tanh %180 : vector<8x128xf32>
    %182 = arith.mulf %177, %181 : vector<8x128xf32>
    %c6 = arith.constant 6 : index
    %c0_39 = arith.constant 0 : index
    %c0_40 = arith.constant 0 : index
    %183 = vector.load %arg1[%c6, %c0_39, %c0_40] : memref<8x8x128xbf16, #tpu.memory_space<vmem>>, vector<1x8x128xbf16>
    %184 = vector.shape_cast %183 : vector<1x8x128xbf16> to vector<8x128xbf16>
    %185 = arith.truncf %182 : vector<8x128xf32> to vector<8x128xbf16>
    %186 = tpu.concatenate %184, %185 in 1 : vector<8x128xbf16>, vector<8x128xbf16> -> vector<8x256xbf16>
    %cst_41 = arith.constant dense<0.000000e+00> : vector<8x512xf32>
    %187 = tpu.matmul %186, %0, %cst_41 {dimension_numbers = #tpu.dot_dimension_numbers<[1], [0], [0], [1], [0, 0, 1, 1], [], []>} : vector<8x256xbf16>, vector<256x512xbf16>, vector<8x512xf32> -> vector<8x512xf32>
    %188 = vector.extract_strided_slice %187 {offsets = [0, 0], sizes = [8, 128], strides = [1, 1]} : vector<8x512xf32> to vector<8x128xf32>
    %189 = arith.negf %188 : vector<8x128xf32>
    %190 = math.exp %189 : vector<8x128xf32>
    %cst_42 = arith.constant 1.000000e+00 : f32
    %191 = vector.broadcast %cst_42 : f32 to vector<8x128xf32>
    %192 = arith.addf %191, %190 : vector<8x128xf32>
    %193 = arith.divf %191, %192 : vector<8x128xf32>
    %194 = vector.extract_strided_slice %187 {offsets = [0, 128], sizes = [8, 128], strides = [1, 1]} : vector<8x512xf32> to vector<8x128xf32>
    %195 = arith.negf %194 : vector<8x128xf32>
    %196 = math.exp %195 : vector<8x128xf32>
    %cst_43 = arith.constant 1.000000e+00 : f32
    %197 = vector.broadcast %cst_43 : f32 to vector<8x128xf32>
    %198 = arith.addf %197, %196 : vector<8x128xf32>
    %199 = arith.divf %197, %198 : vector<8x128xf32>
    %200 = vector.extract_strided_slice %187 {offsets = [0, 256], sizes = [8, 128], strides = [1, 1]} : vector<8x512xf32> to vector<8x128xf32>
    %201 = math.tanh %200 : vector<8x128xf32>
    %202 = vector.extract_strided_slice %187 {offsets = [0, 384], sizes = [8, 128], strides = [1, 1]} : vector<8x512xf32> to vector<8x128xf32>
    %203 = arith.negf %202 : vector<8x128xf32>
    %204 = math.exp %203 : vector<8x128xf32>
    %cst_44 = arith.constant 1.000000e+00 : f32
    %205 = vector.broadcast %cst_44 : f32 to vector<8x128xf32>
    %206 = arith.addf %205, %204 : vector<8x128xf32>
    %207 = arith.divf %205, %206 : vector<8x128xf32>
    %208 = arith.mulf %199, %180 : vector<8x128xf32>
    %209 = arith.mulf %193, %201 : vector<8x128xf32>
    %210 = arith.addf %208, %209 : vector<8x128xf32>
    %211 = math.tanh %210 : vector<8x128xf32>
    %212 = arith.mulf %207, %211 : vector<8x128xf32>
    %c7 = arith.constant 7 : index
    %c0_45 = arith.constant 0 : index
    %c0_46 = arith.constant 0 : index
    %213 = vector.load %arg1[%c7, %c0_45, %c0_46] : memref<8x8x128xbf16, #tpu.memory_space<vmem>>, vector<1x8x128xbf16>
    %214 = vector.shape_cast %213 : vector<1x8x128xbf16> to vector<8x128xbf16>
    %215 = arith.truncf %212 : vector<8x128xf32> to vector<8x128xbf16>
    %216 = tpu.concatenate %214, %215 in 1 : vector<8x128xbf16>, vector<8x128xbf16> -> vector<8x256xbf16>
    %cst_47 = arith.constant dense<0.000000e+00> : vector<8x512xf32>
    %217 = tpu.matmul %216, %0, %cst_47 {dimension_numbers = #tpu.dot_dimension_numbers<[1], [0], [0], [1], [0, 0, 1, 1], [], []>} : vector<8x256xbf16>, vector<256x512xbf16>, vector<8x512xf32> -> vector<8x512xf32>
    %218 = vector.extract_strided_slice %217 {offsets = [0, 0], sizes = [8, 128], strides = [1, 1]} : vector<8x512xf32> to vector<8x128xf32>
    %219 = arith.negf %218 : vector<8x128xf32>
    %220 = math.exp %219 : vector<8x128xf32>
    %cst_48 = arith.constant 1.000000e+00 : f32
    %221 = vector.broadcast %cst_48 : f32 to vector<8x128xf32>
    %222 = arith.addf %221, %220 : vector<8x128xf32>
    %223 = arith.divf %221, %222 : vector<8x128xf32>
    %224 = vector.extract_strided_slice %217 {offsets = [0, 128], sizes = [8, 128], strides = [1, 1]} : vector<8x512xf32> to vector<8x128xf32>
    %225 = arith.negf %224 : vector<8x128xf32>
    %226 = math.exp %225 : vector<8x128xf32>
    %cst_49 = arith.constant 1.000000e+00 : f32
    %227 = vector.broadcast %cst_49 : f32 to vector<8x128xf32>
    %228 = arith.addf %227, %226 : vector<8x128xf32>
    %229 = arith.divf %227, %228 : vector<8x128xf32>
    %230 = vector.extract_strided_slice %217 {offsets = [0, 256], sizes = [8, 128], strides = [1, 1]} : vector<8x512xf32> to vector<8x128xf32>
    %231 = math.tanh %230 : vector<8x128xf32>
    %232 = vector.extract_strided_slice %217 {offsets = [0, 384], sizes = [8, 128], strides = [1, 1]} : vector<8x512xf32> to vector<8x128xf32>
    %233 = arith.negf %232 : vector<8x128xf32>
    %234 = math.exp %233 : vector<8x128xf32>
    %cst_50 = arith.constant 1.000000e+00 : f32
    %235 = vector.broadcast %cst_50 : f32 to vector<8x128xf32>
    %236 = arith.addf %235, %234 : vector<8x128xf32>
    %237 = arith.divf %235, %236 : vector<8x128xf32>
    %238 = arith.mulf %229, %210 : vector<8x128xf32>
    %239 = arith.mulf %223, %231 : vector<8x128xf32>
    %240 = arith.addf %238, %239 : vector<8x128xf32>
    %241 = math.tanh %240 : vector<8x128xf32>
    %242 = arith.mulf %237, %241 : vector<8x128xf32>
    %c0_51 = arith.constant 0 : index
    %c0_52 = arith.constant 0 : index
    %243 = vector.load %arg3[%c0_51, %c0_52] : memref<128x64xf32, #tpu.memory_space<vmem>>, vector<128x64xf32>
    %cst_53 = arith.constant dense<0.000000e+00> : vector<8x64xf32>
    %244 = tpu.matmul %242, %243, %cst_53 {dimension_numbers = #tpu.dot_dimension_numbers<[1], [0], [0], [1], [0, 0, 1, 1], [], []>} : vector<8x128xf32>, vector<128x64xf32>, vector<8x64xf32> -> vector<8x64xf32>
    %c0_54 = arith.constant 0 : index
    %c0_55 = arith.constant 0 : index
    %245 = vector.load %arg4[%c0_54, %c0_55] : memref<1x64xf32, #tpu.memory_space<vmem>>, vector<1x64xf32>
    %246 = vector.broadcast %245 : vector<1x64xf32> to vector<8x64xf32>
    %247 = arith.addf %244, %246 : vector<8x64xf32>
    %cst_56 = arith.constant 0.000000e+00 : f32
    %248 = vector.broadcast %cst_56 : f32 to vector<8x64xf32>
    %249 = arith.maximumf %247, %248 : vector<8x64xf32>
    %c0_57 = arith.constant 0 : index
    %c0_58 = arith.constant 0 : index
    %250 = vector.load %arg5[%c0_57, %c0_58] : memref<1x64xf32, #tpu.memory_space<vmem>>, vector<1x64xf32>
    %251 = tpu.transpose %249, [1, 0] : vector<8x64xf32> -> vector<64x8xf32>
    %cst_59 = arith.constant dense<0.000000e+00> : vector<1x8xf32>
    %252 = tpu.matmul %250, %251, %cst_59 {dimension_numbers = #tpu.dot_dimension_numbers<[1], [0], [0], [1], [0, 0, 1, 1], [], []>} : vector<1x64xf32>, vector<64x8xf32>, vector<1x8xf32> -> vector<1x8xf32>
    %c0_60 = arith.constant 0 : index
    %c0_61 = arith.constant 0 : index
    %253 = vector.load %arg6[%c0_60, %c0_61] : memref<1x1xf32, #tpu.memory_space<vmem>>, vector<1x1xf32>
    %254 = vector.broadcast %253 : vector<1x1xf32> to vector<1x8xf32>
    %255 = arith.addf %252, %254 : vector<1x8xf32>
    %256 = arith.negf %255 : vector<1x8xf32>
    %257 = math.exp %256 : vector<1x8xf32>
    %cst_62 = arith.constant 1.000000e+00 : f32
    %258 = vector.broadcast %cst_62 : f32 to vector<1x8xf32>
    %259 = arith.addf %258, %257 : vector<1x8xf32>
    %260 = arith.divf %258, %259 : vector<1x8xf32>
    %261 = vector.shape_cast %260 : vector<1x8xf32> to vector<1x1x8xf32>
    %c0_63 = arith.constant 0 : index
    %c0_64 = arith.constant 0 : index
    %c0_65 = arith.constant 0 : index
    %262 = vector.load %arg7[%c0_63, %c0_64, %c0_65] : memref<1x1x8xf32, #tpu.memory_space<vmem>>, vector<1x1x8xf32>
    tpu.vector_store %arg7[%c0_63, %c0_64, %c0_65], %261 {strides = array<i32>} : memref<1x1x8xf32, #tpu.memory_space<vmem>>, vector<1x1x8xf32>,
    return
  }
  func.func @transform_0(%arg0: i32) -> (i32, i32, i32) {
    %c0_i32 = arith.constant 0 : i32
    %c0_i32_0 = arith.constant 0 : i32
    %c0_i32_1 = arith.constant 0 : i32
    return %c0_i32, %arg0, %c0_i32_0 : i32, i32, i32
  }
  func.func @transform_1(%arg0: i32) -> (i32, i32) {
    %c0_i32 = arith.constant 0 : i32
    %c0_i32_0 = arith.constant 0 : i32
    %c0_i32_1 = arith.constant 0 : i32
    return %c0_i32, %c0_i32_0 : i32, i32
  }
  func.func @transform_2(%arg0: i32) -> (i32, i32) {
    %c0_i32 = arith.constant 0 : i32
    %c0_i32_0 = arith.constant 0 : i32
    %c0_i32_1 = arith.constant 0 : i32
    return %c0_i32, %c0_i32_0 : i32, i32
  }
  func.func @transform_3(%arg0: i32) -> (i32, i32) {
    %c0_i32 = arith.constant 0 : i32
    %c0_i32_0 = arith.constant 0 : i32
    %c0_i32_1 = arith.constant 0 : i32
    return %c0_i32, %c0_i32_0 : i32, i32
  }
  func.func @transform_4(%arg0: i32) -> (i32, i32) {
    %c0_i32 = arith.constant 0 : i32
    %c0_i32_0 = arith.constant 0 : i32
    %c0_i32_1 = arith.constant 0 : i32
    return %c0_i32, %c0_i32_0 : i32, i32
  }
  func.func @transform_5(%arg0: i32) -> (i32, i32) {
    %c0_i32 = arith.constant 0 : i32
    %c0_i32_0 = arith.constant 0 : i32
    %c0_i32_1 = arith.constant 0 : i32
    return %c0_i32, %c0_i32_0 : i32, i32
  }
  func.func @transform_6(%arg0: i32) -> (i32, i32, i32) {
    %c0_i32 = arith.constant 0 : i32
    %c0_i32_0 = arith.constant 0 : i32
    %c0_i32_1 = arith.constant 0 : i32
    return %arg0, %c0_i32, %c0_i32_0 : i32, i32, i32
  }
}

</mosaic_0001>

<llo_original>
// kernel: cdr3b_bilstm_forward.1
$region0: #{cdr3b_bilstm_forward.1}
  #allocation0 [shape = 'u32[]', space=smem, size = 0x4, offset = 0x4, fixed_abs, tag = 'smem constant byte address 0x4 - core index']
  #allocation1 [shape = 'u32[144,128]{1,0:T(1,128)}', space=vmem, size = 0x12000, scoped, tag = 'internal scratch']
  #allocation2 [shape = 'f32[1,1]{1,0:T(1,128)S(1)}', space=vmem, size = 0x200, scoped, tag = 'scoped memory for cdr3b_bilstm_forward.1']
  %s0 = inlined_call_operand.vmem [shape: bf16[8,8,128], index: 0, kind: input, shape index: {}]
  %s1 = inlined_call_operand.hbm [shape: bf16[256,512], index: 1, kind: input, shape index: {}]
  %s2 = inlined_call_operand.vmem [shape: f32[128,64], index: 2, kind: input, shape index: {}]
  %s3 = inlined_call_operand.vmem [shape: f32[1,64], index: 3, kind: input, shape index: {}]
  %s4 = inlined_call_operand.vmem [shape: f32[1,64], index: 4, kind: input, shape index: {}]
  %s5 = inlined_call_operand.<no memory space> [shape: f32[1,1], index: 5, kind: input, shape index: {}]
  %s6 = inlined_call_operand.vmem [shape: f32[1,1,8], index: 6, kind: output, shape index: {}]
  %s7 = sld [smem:[#allocation0]]
  $region38: #{cdr3b_bilstm_forward.1} parent=0
    _
  %s9 = ssub.s32 1, %s7
  %s10 = scalar_select 0, %s9, %s7
  %v11 = vstv %s5
  %12 = vst [vmem:[#allocation2] sm:$0x1] %v11
  $region1: #{cdr3b_bilstm_forward.1} parent=0
    #allocation3 [shape = 'u8[262144]{0}', space=vmem, size = 0x40000, scoped, tag = 'input window, operand 1, single buffered']
    #allocation4 [shape = 's32[1]{0}', space=sflag, size = 0x4, scoped, tag = 'scoped memory for cdr3b_bilstm_forward.1']
    %13 = vsyncpa [#allocation4], 0
    // Predicated region
    $region2: #{cdr3b_bilstm_forward.1} parent=1 // pred_check
      _
    $region3: #{cdr3b_bilstm_forward.1} parent=1 // pred_check_branch
      %15 = sbr.rel (0) target = $region5
    $region4: #{cdr3b_bilstm_forward.1} parent=1 // pred_region
      _
    $region5: #{cdr3b_bilstm_forward.1} parent=1 // pred_fallthru
      _
    // Predicated region
    $region6: #{cdr3b_bilstm_forward.1} parent=1 // pred_check
      _
    $region7: #{cdr3b_bilstm_forward.1} parent=1 // pred_check_branch
      %17 = sbr.rel (0) target = $region9
    $region8: #{cdr3b_bilstm_forward.1} parent=1 // pred_region
      %s19 = ssub.s32 8192, 8192
      %20 = vsyncadd [#allocation4], %s19
      %s21 = sshll.u32 [#allocation3], 4
      %s22 = int_to_ptr.vmem [resolvable:$true] %s21
      %27 = dma.hbm_to_vmem [thread:$0]  %s1, 8192, %s22, [#allocation4], 256, 256, 16
    $region9: #{cdr3b_bilstm_forward.1} parent=1 // pred_fallthru
      _
    // Predicated region
    $region10: #{cdr3b_bilstm_forward.1} parent=1 // pred_check
      _
    $region11: #{cdr3b_bilstm_forward.1} parent=1 // pred_check_branch
      %29 = sbr.rel (0) target = $region13
    $region12: #{cdr3b_bilstm_forward.1} parent=1 // pred_region
      _
    $region13: #{cdr3b_bilstm_forward.1} parent=1 // pred_fallthru
      _
    // Predicated region
    $region14: #{cdr3b_bilstm_forward.1} parent=1 // pred_check
      _
    $region15: #{cdr3b_bilstm_forward.1} parent=1 // pred_check_branch
      %31 = sbr.rel (0) target = $region17
    $region16: #{cdr3b_bilstm_forward.1} parent=1 // pred_region
      _
    $region17: #{cdr3b_bilstm_forward.1} parent=1 // pred_fallthru
      _
    // Predicated region
    $region18: #{cdr3b_bilstm_forward.1} parent=1 // pred_check
      _
    $region19: #{cdr3b_bilstm_forward.1} parent=1 // pred_check_branch
      %33 = sbr.rel (0) target = $region21
    $region20: #{cdr3b_bilstm_forward.1} parent=1 // pred_region
      _
    $region21: #{cdr3b_bilstm_forward.1} parent=1 // pred_fallthru
      _
    // Predicated region
    $region22: #{cdr3b_bilstm_forward.1} parent=1 // pred_check
      _
    $region23: #{cdr3b_bilstm_forward.1} parent=1 // pred_check_branch
      %35 = sbr.rel (0) target = $region25
    $region24: #{cdr3b_bilstm_forward.1} parent=1 // pred_region
      _
    $region25: #{cdr3b_bilstm_forward.1} parent=1 // pred_fallthru
      _
    // Predicated region
    $region26: #{cdr3b_bilstm_forward.1} parent=1 // pred_check
      _
    $region27: #{cdr3b_bilstm_forward.1} parent=1 // pred_check_branch
      %37 = sbr.rel (0) target = $region29
    $region28: #{cdr3b_bilstm_forward.1} parent=1 // pred_region
      %38 = dma.done [#allocation4], 8192
    $region29: #{cdr3b_bilstm_forward.1} parent=1 // pred_fallthru
      _
    %v40 = vld [vmem:[#allocation3] sm:$0xff]
    %v41 = vld [vmem:[#allocation3 + $0x8] sm:$0xff]
    %v42 = vld [vmem:[#allocation3 + $0x10] sm:$0xff]
    %v43 = vld [vmem:[#allocation3 + $0x18] sm:$0xff]
    %v44 = vld [vmem:[#allocation3 + $0x20] sm:$0xff]
    %v45 = vld [vmem:[#allocation3 + $0x28] sm:$0xff]
    %v46 = vld [vmem:[#allocation3 + $0x30] sm:$0xff]
    %v47 = vld [vmem:[#allocation3 + $0x38] sm:$0xff]
    %v48 = vld [vmem:[#allocation3 + $0x40] sm:$0xff]
    %v49 = vld [vmem:[#allocation3 + $0x48] sm:$0xff]
    %v50 = vld [vmem:[#allocation3 + $0x50] sm:$0xff]
    %v51 = vld [vmem:[#allocation3 + $0x58] sm:$0xff]
    %v52 = vld [vmem:[#allocation3 + $0x60] sm:$0xff]
    %v53 = vld [vmem:[#allocation3 + $0x68] sm:$0xff]
    %v54 = vld [vmem:[#allocation3 + $0x70] sm:$0xff]
    %v55 = vld [vmem:[#allocation3 + $0x78] sm:$0xff]
    %v56 = vld [vmem:[#allocation3 + $0x80] sm:$0xff]
    %v57 = vld [vmem:[#allocation3 + $0x88] sm:$0xff]
    %v58 = vld [vmem:[#allocation3 + $0x90] sm:$0xff]
    %v59 = vld [vmem:[#allocation3 + $0x98] sm:$0xff]
    %v60 = vld [vmem:[#allocation3 + $0xa0] sm:$0xff]
    %v61 = vld [vmem:[#allocation3 + $0xa8] sm:$0xff]
    %v62 = vld [vmem:[#allocation3 + $0xb0] sm:$0xff]
    %v63 = vld [vmem:[#allocation3 + $0xb8] sm:$0xff]
    %v64 = vld [vmem:[#allocation3 + $0xc0] sm:$0xff]
    %v65 = vld [vmem:[#allocation3 + $0xc8] sm:$0xff]
    %v66 = vld [vmem:[#allocation3 + $0xd0] sm:$0xff]
    %v67 = vld [vmem:[#allocation3 + $0xd8] sm:$0xff]
    %v68 = vld [vmem:[#allocation3 + $0xe0] sm:$0xff]
    %v69 = vld [vmem:[#allocation3 + $0xe8] sm:$0xff]
    %v70 = vld [vmem:[#allocation3 + $0xf0] sm:$0xff]
    %v71 = vld [vmem:[#allocation3 + $0xf8] sm:$0xff]
    %v72 = vld [vmem:[#allocation3 + $0x100] sm:$0xff]
    %v73 = vld [vmem:[#allocation3 + $0x108] sm:$0xff]
    %v74 = vld [vmem:[#allocation3 + $0x110] sm:$0xff]
    %v75 = vld [vmem:[#allocation3 + $0x118] sm:$0xff]
    %v76 = vld [vmem:[#allocation3 + $0x120] sm:$0xff]
    %v77 = vld [vmem:[#allocation3 + $0x128] sm:$0xff]
    %v78 = vld [vmem:[#allocation3 + $0x130] sm:$0xff]
    %v79 = vld [vmem:[#allocation3 + $0x138] sm:$0xff]
    %v80 = vld [vmem:[#allocation3 + $0x140] sm:$0xff]
    %v81 = vld [vmem:[#allocation3 + $0x148] sm:$0xff]
    %v82 = vld [vmem:[#allocation3 + $0x150] sm:$0xff]
    %v83 = vld [vmem:[#allocation3 + $0x158] sm:$0xff]
    %v84 = vld [vmem:[#allocation3 + $0x160] sm:$0xff]
    %v85 = vld [vmem:[#allocation3 + $0x168] sm:$0xff]
    %v86 = vld [vmem:[#allocation3 + $0x170] sm:$0xff]
    %v87 = vld [vmem:[#allocation3 + $0x178] sm:$0xff]
    %v88 = vld [vmem:[#allocation3 + $0x180] sm:$0xff]
    %v89 = vld [vmem:[#allocation3 + $0x188] sm:$0xff]
    %v90 = vld [vmem:[#allocation3 + $0x190] sm:$0xff]
    %v91 = vld [vmem:[#allocation3 + $0x198] sm:$0xff]
    %v92 = vld [vmem:[#allocation3 + $0x1a0] sm:$0xff]
    %v93 = vld [vmem:[#allocation3 + $0x1a8] sm:$0xff]
    %v94 = vld [vmem:[#allocation3 + $0x1b0] sm:$0xff]
    %v95 = vld [vmem:[#allocation3 + $0x1b8] sm:$0xff]
    %v96 = vld [vmem:[#allocation3 + $0x1c0] sm:$0xff]
    %v97 = vld [vmem:[#allocation3 + $0x1c8] sm:$0xff]
    %v98 = vld [vmem:[#allocation3 + $0x1d0] sm:$0xff]
    %v99 = vld [vmem:[#allocation3 + $0x1d8] sm:$0xff]
    %v100 = vld [vmem:[#allocation3 + $0x1e0] sm:$0xff]
    %v101 = vld [vmem:[#allocation3 + $0x1e8] sm:$0xff]
    %v102 = vld [vmem:[#allocation3 + $0x1f0] sm:$0xff]
    %v103 = vld [vmem:[#allocation3 + $0x1f8] sm:$0xff]
    %v104 = vld [vmem:[%s0] sm:$0xf]
    %v169 = vunpack.c.l.b16 %v40
    %v170 = vunpack.c.h.b16 %v40
    %v171 = vunpack.c.l.b16 %v41
    %v172 = vunpack.c.h.b16 %v41
    %v173 = vunpack.c.l.b16 %v42
    %v174 = vunpack.c.h.b16 %v42
    %v175 = vunpack.c.l.b16 %v43
    %v176 = vunpack.c.h.b16 %v43
    %v177 = vunpack.c.l.b16 %v44
    %v178 = vunpack.c.h.b16 %v44
    %v179 = vunpack.c.l.b16 %v45
    %v180 = vunpack.c.h.b16 %v45
    %v181 = vunpack.c.l.b16 %v46
    %v182 = vunpack.c.h.b16 %v46
    %v183 = vunpack.c.l.b16 %v47
    %v184 = vunpack.c.h.b16 %v47
    %v185 = vunpack.c.l.b16 %v48
    %v186 = vunpack.c.h.b16 %v48
    %v187 = vunpack.c.l.b16 %v49
    %v188 = vunpack.c.h.b16 %v49
    %v189 = vunpack.c.l.b16 %v50
    %v190 = vunpack.c.h.b16 %v50
    %v191 = vunpack.c.l.b16 %v51
    %v192 = vunpack.c.h.b16 %v51
    %v193 = vunpack.c.l.b16 %v52
    %v194 = vunpack.c.h.b16 %v52
    %v195 = vunpack.c.l.b16 %v53
    %v196 = vunpack.c.h.b16 %v53
    %v197 = vunpack.c.l.b16 %v54
    %v198 = vunpack.c.h.b16 %v54
    %v199 = vunpack.c.l.b16 %v55
    %v200 = vunpack.c.h.b16 %v55
    %v201 = vunpack.c.l.b16 %v56
    %v202 = vunpack.c.h.b16 %v56
    %v203 = vunpack.c.l.b16 %v57
    %v204 = vunpack.c.h.b16 %v57
    %v205 = vunpack.c.l.b16 %v58
    %v206 = vunpack.c.h.b16 %v58
    %v207 = vunpack.c.l.b16 %v59
    %v208 = vunpack.c.h.b16 %v59
    %v209 = vunpack.c.l.b16 %v60
    %v210 = vunpack.c.h.b16 %v60
    %v211 = vunpack.c.l.b16 %v61
    %v212 = vunpack.c.h.b16 %v61
    %v213 = vunpack.c.l.b16 %v62
    %v214 = vunpack.c.h.b16 %v62
    %v215 = vunpack.c.l.b16 %v63
    %v216 = vunpack.c.h.b16 %v63
    %v217 = vunpack.c.l.b16 %v64
    %v218 = vunpack.c.h.b16 %v64
    %v219 = vunpack.c.l.b16 %v65
    %v220 = vunpack.c.h.b16 %v65
    %v221 = vunpack.c.l.b16 %v66
    %v222 = vunpack.c.h.b16 %v66
    %v223 = vunpack.c.l.b16 %v67
    %v224 = vunpack.c.h.b16 %v67
    %v225 = vunpack.c.l.b16 %v68
    %v226 = vunpack.c.h.b16 %v68
    %v227 = vunpack.c.l.b16 %v69
    %v228 = vunpack.c.h.b16 %v69
    %v229 = vunpack.c.l.b16 %v70
    %v230 = vunpack.c.h.b16 %v70
    %v231 = vunpack.c.l.b16 %v71
    %v232 = vunpack.c.h.b16 %v71
    %v233 = vunpack.c.l.b16 %v72
    %v234 = vunpack.c.h.b16 %v72
    %v235 = vunpack.c.l.b16 %v73
    %v236 = vunpack.c.h.b16 %v73
    %v237 = vunpack.c.l.b16 %v74
    %v238 = vunpack.c.h.b16 %v74
    %v239 = vunpack.c.l.b16 %v75
    %v240 = vunpack.c.h.b16 %v75
    %v241 = vunpack.c.l.b16 %v76
    %v242 = vunpack.c.h.b16 %v76
    %v243 = vunpack.c.l.b16 %v77
    %v244 = vunpack.c.h.b16 %v77
    %v245 = vunpack.c.l.b16 %v78
    %v246 = vunpack.c.h.b16 %v78
    %v247 = vunpack.c.l.b16 %v79
    %v248 = vunpack.c.h.b16 %v79
    %v249 = vunpack.c.l.b16 %v80
    %v250 = vunpack.c.h.b16 %v80
    %v251 = vunpack.c.l.b16 %v81
    %v252 = vunpack.c.h.b16 %v81
    %v253 = vunpack.c.l.b16 %v82
    %v254 = vunpack.c.h.b16 %v82
    %v255 = vunpack.c.l.b16 %v83
    %v256 = vunpack.c.h.b16 %v83
    %v257 = vunpack.c.l.b16 %v84
    %v258 = vunpack.c.h.b16 %v84
    %v259 = vunpack.c.l.b16 %v85
    %v260 = vunpack.c.h.b16 %v85
    %v261 = vunpack.c.l.b16 %v86
    %v262 = vunpack.c.h.b16 %v86
    %v263 = vunpack.c.l.b16 %v87
    %v264 = vunpack.c.h.b16 %v87
    %v265 = vunpack.c.l.b16 %v88
    %v266 = vunpack.c.h.b16 %v88
    %v267 = vunpack.c.l.b16 %v89
    %v268 = vunpack.c.h.b16 %v89
    %v269 = vunpack.c.l.b16 %v90
    %v270 = vunpack.c.h.b16 %v90
    %v271 = vunpack.c.l.b16 %v91
    %v272 = vunpack.c.h.b16 %v91
    %v273 = vunpack.c.l.b16 %v92
    %v274 = vunpack.c.h.b16 %v92
    %v275 = vunpack.c.l.b16 %v93
    %v276 = vunpack.c.h.b16 %v93
    %v277 = vunpack.c.l.b16 %v94
    %v278 = vunpack.c.h.b16 %v94
    %v279 = vunpack.c.l.b16 %v95
    %v280 = vunpack.c.h.b16 %v95
    %v281 = vunpack.c.l.b16 %v96
    %v282 = vunpack.c.h.b16 %v96
    %v283 = vunpack.c.l.b16 %v97
    %v284 = vunpack.c.h.b16 %v97
    %v285 = vunpack.c.l.b16 %v98
    %v286 = vunpack.c.h.b16 %v98
    %v287 = vunpack.c.l.b16 %v99
    %v288 = vunpack.c.h.b16 %v99
    %v289 = vunpack.c.l.b16 %v100
    %v290 = vunpack.c.h.b16 %v100
    %v291 = vunpack.c.l.b16 %v101
    %v292 = vunpack.c.h.b16 %v101
    %v293 = vunpack.c.l.b16 %v102
    %v294 = vunpack.c.h.b16 %v102
    %v295 = vunpack.c.l.b16 %v103
    %v296 = vunpack.c.h.b16 %v103
    %v297 = vpack.c.b16 %v173, %v169
    %v298 = vpack.c.b16 %v174, %v170
    %v299 = vpack.c.b16 %v175, %v171
    %v300 = vpack.c.b16 %v176, %v172
    %v301 = vpack.c.b16 %v181, %v177
    %v302 = vpack.c.b16 %v182, %v178
    %v303 = vpack.c.b16 %v183, %v179
    %v304 = vpack.c.b16 %v184, %v180
    %v305 = vpack.c.b16 %v189, %v185
    %v306 = vpack.c.b16 %v190, %v186
    %v307 = vpack.c.b16 %v191, %v187
    %v308 = vpack.c.b16 %v192, %v188
    %v309 = vpack.c.b16 %v197, %v193
    %v310 = vpack.c.b16 %v198, %v194
    %v311 = vpack.c.b16 %v199, %v195
    %v312 = vpack.c.b16 %v200, %v196
    %v313 = vpack.c.b16 %v205, %v201
    %v314 = vpack.c.b16 %v206, %v202
    %v315 = vpack.c.b16 %v207, %v203
    %v316 = vpack.c.b16 %v208, %v204
    %v317 = vpack.c.b16 %v213, %v209
    %v318 = vpack.c.b16 %v214, %v210
    %v319 = vpack.c.b16 %v215, %v211
    %v320 = vpack.c.b16 %v216, %v212
    %v321 = vpack.c.b16 %v221, %v217
    %v322 = vpack.c.b16 %v222, %v218
    %v323 = vpack.c.b16 %v223, %v219
    %v324 = vpack.c.b16 %v224, %v220
    %v325 = vpack.c.b16 %v229, %v225
    %v326 = vpack.c.b16 %v230, %v226
    %v327 = vpack.c.b16 %v231, %v227
    %v328 = vpack.c.b16 %v232, %v228
    %v329 = vpack.c.b16 %v237, %v233
    %v330 = vpack.c.b16 %v238, %v234
    %v331 = vpack.c.b16 %v239, %v235
    %v332 = vpack.c.b16 %v240, %v236
    %v333 = vpack.c.b16 %v245, %v241
    %v334 = vpack.c.b16 %v246, %v242
    %v335 = vpack.c.b16 %v247, %v243
    %v336 = vpack.c.b16 %v248, %v244
    %v337 = vpack.c.b16 %v253, %v249
    %v338 = vpack.c.b16 %v254, %v250
    %v339 = vpack.c.b16 %v255, %v251
    %v340 = vpack.c.b16 %v256, %v252
    %v341 = vpack.c.b16 %v261, %v257
    %v342 = vpack.c.b16 %v262, %v258
    %v343 = vpack.c.b16 %v263, %v259
    %v344 = vpack.c.b16 %v264, %v260
    %v345 = vpack.c.b16 %v269, %v265
    %v346 = vpack.c.b16 %v270, %v266
    %v347 = vpack.c.b16 %v271, %v267
    %v348 = vpack.c.b16 %v272, %v268
    %v349 = vpack.c.b16 %v277, %v273
    %v350 = vpack.c.b16 %v278, %v274
    %v351 = vpack.c.b16 %v279, %v275
    %v352 = vpack.c.b16 %v280, %v276
    %v353 = vpack.c.b16 %v285, %v281
    %v354 = vpack.c.b16 %v286, %v282
    %v355 = vpack.c.b16 %v287, %v283
    %v356 = vpack.c.b16 %v288, %v284
    %v357 = vpack.c.b16 %v293, %v289
    %v358 = vpack.c.b16 %v294, %v290
    %v359 = vpack.c.b16 %v295, %v291
    %v360 = vpack.c.b16 %v296, %v292
    %425 = vmatprep.subr.bf16.mxu0 %v298
    %426 = vmatpush1.bf16.msra.mxu0 %v297
    %427 = vmatprep.subr.bf16.mxu0 %v302
    %428 = vmatpush1.bf16.msra.mxu0 %v301
    %429 = vmatprep.subr.bf16.mxu0 %v306
    %430 = vmatpush1.bf16.msra.mxu0 %v305
    %431 = vmatprep.subr.bf16.mxu0 %v310
    %432 = vmatpush1.bf16.msra.mxu0 %v309
    %433 = vmatprep.subr.bf16.mxu0 %v314
    %434 = vmatpush1.bf16.msra.mxu0 %v313
    %435 = vmatprep.subr.bf16.mxu0 %v318
    %436 = vmatpush1.bf16.msra.mxu0 %v317
    %437 = vmatprep.subr.bf16.mxu0 %v322
    %438 = vmatpush1.bf16.msra.mxu0 %v321
    %439 = vmatprep.subr.bf16.mxu0 %v326
    %440 = vmatpush1.bf16.msra.mxu0 %v325
    %441 = vmatprep.subr.bf16.mxu0 %v330
    %442 = vmatpush1.bf16.msra.mxu0 %v329
    %443 = vmatprep.subr.bf16.mxu0 %v334
    %444 = vmatpush1.bf16.msra.mxu0 %v333
    %445 = vmatprep.subr.bf16.mxu0 %v338
    %446 = vmatpush1.bf16.msra.mxu0 %v337
    %447 = vmatprep.subr.bf16.mxu0 %v342
    %448 = vmatpush1.bf16.msra.mxu0 %v341
    %449 = vmatprep.subr.bf16.mxu0 %v346
    %450 = vmatpush1.bf16.msra.mxu0 %v345
    %451 = vmatprep.subr.bf16.mxu0 %v350
    %452 = vmatpush1.bf16.msra.mxu0 %v349
    %453 = vmatprep.subr.bf16.mxu0 %v354
    %454 = vmatpush1.bf16.msra.mxu0 %v353
    %455 = vmatprep.subr.bf16.mxu0 %v358
    %456 = vmatpush1.bf16.msra.mxu0 %v357
    %457 = vmatprep.mubr.bf16.mxu0 0
    %458 = vmatmul.mubr.bf16.gmra.mrb[0].mxu0 %v104
    %v459 = vpop.f32.mrb[0].mxu0
    %v460 = vadd.f32 0.0, %v459
    %v461 = vpop.f32.mrb[0].mxu0
    %v462 = vadd.f32 0.0, %v461
    %v463 = vpop.f32.mrb[0].mxu0
    %v464 = vpop.f32.mrb[0].mxu0
    %465 = vdwg.mxu0
    %466 = vmatprep.subr.bf16.mxu0 %v300
    %467 = vmatpush1.bf16.msra.mxu0 %v299
    %468 = vmatprep.subr.bf16.mxu0 %v304
    %469 = vmatpush1.bf16.msra.mxu0 %v303
    %470 = vmatprep.subr.bf16.mxu0 %v308
    %471 = vmatpush1.bf16.msra.mxu0 %v307
    %472 = vmatprep.subr.bf16.mxu0 %v312
    %473 = vmatpush1.bf16.msra.mxu0 %v311
    %474 = vmatprep.subr.bf16.mxu0 %v316
    %475 = vmatpush1.bf16.msra.mxu0 %v315
    %476 = vmatprep.subr.bf16.mxu0 %v320
    %477 = vmatpush1.bf16.msra.mxu0 %v319
    %478 = vmatprep.subr.bf16.mxu0 %v324
    %479 = vmatpush1.bf16.msra.mxu0 %v323
    %480 = vmatprep.subr.bf16.mxu0 %v328
    %481 = vmatpush1.bf16.msra.mxu0 %v327
    %482 = vmatprep.subr.bf16.mxu0 %v332
    %483 = vmatpush1.bf16.msra.mxu0 %v331
    %484 = vmatprep.subr.bf16.mxu0 %v336
    %485 = vmatpush1.bf16.msra.mxu0 %v335
    %486 = vmatprep.subr.bf16.mxu0 %v340
    %487 = vmatpush1.bf16.msra.mxu0 %v339
    %488 = vmatprep.subr.bf16.mxu0 %v344
    %489 = vmatpush1.bf16.msra.mxu0 %v343
    %490 = vmatprep.subr.bf16.mxu0 %v348
    %491 = vmatpush1.bf16.msra.mxu0 %v347
    %492 = vmatprep.subr.bf16.mxu0 %v352
    %493 = vmatpush1.bf16.msra.mxu0 %v351
    %494 = vmatprep.subr.bf16.mxu0 %v356
    %495 = vmatpush1.bf16.msra.mxu0 %v355
    %496 = vmatprep.subr.bf16.mxu0 %v360
    %497 = vmatpush1.bf16.msra.mxu0 %v359
    %498 = vmatprep.mubr.bf16.mxu0 0
    %499 = vmatmul.mubr.bf16.gmra.mrb[0].mxu0 %v104
    %v500 = vpop.f32.mrb[0].mxu0
    %v501 = vadd.f32 0.0, %v500
    %v502 = vpop.f32.mrb[0].mxu0
    %v503 = vadd.f32 0.0, %v502
    %v504 = vpop.f32.mrb[0].mxu0
    %v505 = vpop.f32.mrb[0].mxu0
    %506 = vdwg.mxu0
    %v507 = vxor.u32 %v460, 2147483648
    %v508 = vmul.f32 %v507, 1.442695
    %v509 = vpow.pop %v508
    %v510 = vadd.f32 %v509, 1.0
    %v511 = vrcp.pop %v510
    %v512 = vmul.f32 1.0, %v511
    %v513 = vxor.u32 %v462, 2147483648
    %v514 = vmul.f32 %v513, 1.442695
    %v515 = vpow.pop %v514
    %v516 = vadd.f32 %v515, 1.0
    %v517 = vrcp.pop %v516
    %v518 = vmul.f32 1.0, %v517
    %v519 = vtanh.pop %v501
    %v520 = vxor.u32 %v503, 2147483648
    %v521 = vmul.f32 %v520, 1.442695
    %v522 = vpow.pop %v521
    %v523 = vadd.f32 %v522, 1.0
    %v524 = vrcp.pop %v523
    %v525 = vmul.f32 1.0, %v524
    %v526 = vmul.f32 %v518, 0.0
    %v527 = vmul.f32 %v512, %v519
    %v528 = vadd.f32 %v526, %v527
    %v529 = vtanh.pop %v528
    %v530 = vmul.f32 %v525, %v529
    %s531 = scalar_lea.vmem %s0, 4
    %v532 = vld [vmem:[%s531] sm:$0xf]
    %v533 = vpack.c.bf16 %v530, %v530
    %534 = vmatprep.subr.bf16.mxu0 %v298
    %535 = vmatpush1.bf16.msra.mxu0 %v297
    %536 = vmatprep.subr.bf16.mxu0 %v302
    %537 = vmatpush1.bf16.msra.mxu0 %v301
    %538 = vmatprep.subr.bf16.mxu0 %v306
    %539 = vmatpush1.bf16.msra.mxu0 %v305
    %540 = vmatprep.subr.bf16.mxu0 %v310
    %541 = vmatpush1.bf16.msra.mxu0 %v309
    %542 = vmatprep.subr.bf16.mxu0 %v314
    %543 = vmatpush1.bf16.msra.mxu0 %v313
    %544 = vmatprep.subr.bf16.mxu0 %v318
    %545 = vmatpush1.bf16.msra.mxu0 %v317
    %546 = vmatprep.subr.bf16.mxu0 %v322
    %547 = vmatpush1.bf16.msra.mxu0 %v321
    %548 = vmatprep.subr.bf16.mxu0 %v326
    %549 = vmatpush1.bf16.msra.mxu0 %v325
    %550 = vmatprep.subr.bf16.mxu0 %v330
    %551 = vmatpush1.bf16.msra.mxu0 %v329
    %552 = vmatprep.subr.bf16.mxu0 %v334
    %553 = vmatpush1.bf16.msra.mxu0 %v333
    %554 = vmatprep.subr.bf16.mxu0 %v338
    %555 = vmatpush1.bf16.msra.mxu0 %v337
    %556 = vmatprep.subr.bf16.mxu0 %v342
    %557 = vmatpush1.bf16.msra.mxu0 %v341
    %558 = vmatprep.subr.bf16.mxu0 %v346
    %559 = vmatpush1.bf16.msra.mxu0 %v345
    %560 = vmatprep.subr.bf16.mxu0 %v350
    %561 = vmatpush1.bf16.msra.mxu0 %v349
    %562 = vmatprep.subr.bf16.mxu0 %v354
    %563 = vmatpush1.bf16.msra.mxu0 %v353
    %564 = vmatprep.subr.bf16.mxu0 %v358
    %565 = vmatpush1.bf16.msra.mxu0 %v357
    %566 = vmatprep.mubr.bf16.mxu0 %v533
    %567 = vmatmul.mubr.bf16.gmra.mrb[0].mxu0 %v532
    %v568 = vpop.f32.mrb[0].mxu0
    %v569 = vadd.f32 0.0, %v568
    %v570 = vpop.f32.mrb[0].mxu0
    %v571 = vadd.f32 0.0, %v570
    %v572 = vpop.f32.mrb[0].mxu0
    %v573 = vpop.f32.mrb[0].mxu0
    %574 = vdwg.mxu0
    %575 = vmatprep.subr.bf16.mxu0 %v300
    %576 = vmatpush1.bf16.msra.mxu0 %v299
    %577 = vmatprep.subr.bf16.mxu0 %v304
    %578 = vmatpush1.bf16.msra.mxu0 %v303
    %579 = vmatprep.subr.bf16.mxu0 %v308
    %580 = vmatpush1.bf16.msra.mxu0 %v307
    %581 = vmatprep.subr.bf16.mxu0 %v312
    %582 = vmatpush1.bf16.msra.mxu0 %v311
    %583 = vmatprep.subr.bf16.mxu0 %v316
    %584 = vmatpush1.bf16.msra.mxu0 %v315
    %585 = vmatprep.subr.bf16.mxu0 %v320
    %586 = vmatpush1.bf16.msra.mxu0 %v319
    %587 = vmatprep.subr.bf16.mxu0 %v324
    %588 = vmatpush1.bf16.msra.mxu0 %v323
    %589 = vmatprep.subr.bf16.mxu0 %v328
    %590 = vmatpush1.bf16.msra.mxu0 %v327
    %591 = vmatprep.subr.bf16.mxu0 %v332
    %592 = vmatpush1.bf16.msra.mxu0 %v331
    %593 = vmatprep.subr.bf16.mxu0 %v336
    %594 = vmatpush1.bf16.msra.mxu0 %v335
    %595 = vmatprep.subr.bf16.mxu0 %v340
    %596 = vmatpush1.bf16.msra.mxu0 %v339
    %597 = vmatprep.subr.bf16.mxu0 %v344
    %598 = vmatpush1.bf16.msra.mxu0 %v343
    %599 = vmatprep.subr.bf16.mxu0 %v348
    %600 = vmatpush1.bf16.msra.mxu0 %v347
    %601 = vmatprep.subr.bf16.mxu0 %v352
    %602 = vmatpush1.bf16.msra.mxu0 %v351
    %603 = vmatprep.subr.bf16.mxu0 %v356
    %604 = vmatpush1.bf16.msra.mxu0 %v355
    %605 = vmatprep.subr.bf16.mxu0 %v360
    %606 = vmatpush1.bf16.msra.mxu0 %v359
    %607 = vmatprep.mubr.bf16.mxu0 %v533
    %608 = vmatmul.mubr.bf16.gmra.mrb[0].mxu0 %v532
    %v609 = vpop.f32.mrb[0].mxu0
    %v610 = vadd.f32 0.0, %v609
    %v611 = vpop.f32.mrb[0].mxu0
    %v612 = vadd.f32 0.0, %v611
    %v613 = vpop.f32.mrb[0].mxu0
    %v614 = vpop.f32.mrb[0].mxu0
    %615 = vdwg.mxu0
    %v616 = vxor.u32 %v569, 2147483648
    %v617 = vmul.f32 %v616, 1.442695
    %v618 = vpow.pop %v617
    %v619 = vadd.f32 %v618, 1.0
    %v620 = vrcp.pop %v619
    %v621 = vmul.f32 1.0, %v620
    %v622 = vxor.u32 %v571, 2147483648
    %v623 = vmul.f32 %v622, 1.442695
    %v624 = vpow.pop %v623
    %v625 = vadd.f32 %v624, 1.0
    %v626 = vrcp.pop %v625
    %v627 = vmul.f32 1.0, %v626
    %v628 = vtanh.pop %v610
    %v629 = vxor.u32 %v612, 2147483648
    %v630 = vmul.f32 %v629, 1.442695
    %v631 = vpow.pop %v630
    %v632 = vadd.f32 %v631, 1.0
    %v633 = vrcp.pop %v632
    %v634 = vmul.f32 1.0, %v633
    %v635 = vmul.f32 %v627, %v528
    %v636 = vmul.f32 %v621, %v628
    %v637 = vadd.f32 %v635, %v636
    %v638 = vtanh.pop %v637
    %v639 = vmul.f32 %v634, %v638
    %s640 = scalar_lea.vmem %s0, 8
    %v641 = vld [vmem:[%s640] sm:$0xf]
    %v642 = vpack.c.bf16 %v639, %v639
    %643 = vmatprep.subr.bf16.mxu0 %v298
    %644 = vmatpush1.bf16.msra.mxu0 %v297
    %645 = vmatprep.subr.bf16.mxu0 %v302
    %646 = vmatpush1.bf16.msra.mxu0 %v301
    %647 = vmatprep.subr.bf16.mxu0 %v306
    %648 = vmatpush1.bf16.msra.mxu0 %v305
    %649 = vmatprep.subr.bf16.mxu0 %v310
    %650 = vmatpush1.bf16.msra.mxu0 %v309
    %651 = vmatprep.subr.bf16.mxu0 %v314
    %652 = vmatpush1.bf16.msra.mxu0 %v313
    %653 = vmatprep.subr.bf16.mxu0 %v318
    %654 = vmatpush1.bf16.msra.mxu0 %v317
    %655 = vmatprep.subr.bf16.mxu0 %v322
    %656 = vmatpush1.bf16.msra.mxu0 %v321
    %657 = vmatprep.subr.bf16.mxu0 %v326
    %658 = vmatpush1.bf16.msra.mxu0 %v325
    %659 = vmatprep.subr.bf16.mxu0 %v330
    %660 = vmatpush1.bf16.msra.mxu0 %v329
    %661 = vmatprep.subr.bf16.mxu0 %v334
    %662 = vmatpush1.bf16.msra.mxu0 %v333
    %663 = vmatprep.subr.bf16.mxu0 %v338
    %664 = vmatpush1.bf16.msra.mxu0 %v337
    %665 = vmatprep.subr.bf16.mxu0 %v342
    %666 = vmatpush1.bf16.msra.mxu0 %v341
    %667 = vmatprep.subr.bf16.mxu0 %v346
    %668 = vmatpush1.bf16.msra.mxu0 %v345
    %669 = vmatprep.subr.bf16.mxu0 %v350
    %670 = vmatpush1.bf16.msra.mxu0 %v349
    %671 = vmatprep.subr.bf16.mxu0 %v354
    %672 = vmatpush1.bf16.msra.mxu0 %v353
    %673 = vmatprep.subr.bf16.mxu0 %v358
    %674 = vmatpush1.bf16.msra.mxu0 %v357
    %675 = vmatprep.mubr.bf16.mxu0 %v642
    %676 = vmatmul.mubr.bf16.gmra.mrb[0].mxu0 %v641
    %v677 = vpop.f32.mrb[0].mxu0
    %v678 = vadd.f32 0.0, %v677
    %v679 = vpop.f32.mrb[0].mxu0
    %v680 = vadd.f32 0.0, %v679
    %v681 = vpop.f32.mrb[0].mxu0
    %v682 = vpop.f32.mrb[0].mxu0
    %683 = vdwg.mxu0
    %684 = vmatprep.subr.bf16.mxu0 %v300
    %685 = vmatpush1.bf16.msra.mxu0 %v299
    %686 = vmatprep.subr.bf16.mxu0 %v304
    %687 = vmatpush1.bf16.msra.mxu0 %v303
    %688 = vmatprep.subr.bf16.mxu0 %v308
    %689 = vmatpush1.bf16.msra.mxu0 %v307
    %690 = vmatprep.subr.bf16.mxu0 %v312
    %691 = vmatpush1.bf16.msra.mxu0 %v311
    %692 = vmatprep.subr.bf16.mxu0 %v316
    %693 = vmatpush1.bf16.msra.mxu0 %v315
    %694 = vmatprep.subr.bf16.mxu0 %v320
    %695 = vmatpush1.bf16.msra.mxu0 %v319
    %696 = vmatprep.subr.bf16.mxu0 %v324
    %697 = vmatpush1.bf16.msra.mxu0 %v323
    %698 = vmatprep.subr.bf16.mxu0 %v328
    %699 = vmatpush1.bf16.msra.mxu0 %v327
    %700 = vmatprep.subr.bf16.mxu0 %v332
    %701 = vmatpush1.bf16.msra.mxu0 %v331
    %702 = vmatprep.subr.bf16.mxu0 %v336
    %703 = vmatpush1.bf16.msra.mxu0 %v335
    %704 = vmatprep.subr.bf16.mxu0 %v340
    %705 = vmatpush1.bf16.msra.mxu0 %v339
    %706 = vmatprep.subr.bf16.mxu0 %v344
    %707 = vmatpush1.bf16.msra.mxu0 %v343
    %708 = vmatprep.subr.bf16.mxu0 %v348
    %709 = vmatpush1.bf16.msra.mxu0 %v347
    %710 = vmatprep.subr.bf16.mxu0 %v352
    %711 = vmatpush1.bf16.msra.mxu0 %v351
    %712 = vmatprep.subr.bf16.mxu0 %v356
    %713 = vmatpush1.bf16.msra.mxu0 %v355
    %714 = vmatprep.subr.bf16.mxu0 %v360
    %715 = vmatpush1.bf16.msra.mxu0 %v359
    %716 = vmatprep.mubr.bf16.mxu0 %v642
    %717 = vmatmul.mubr.bf16.gmra.mrb[0].mxu0 %v641
    %v718 = vpop.f32.mrb[0].mxu0
    %v719 = vadd.f32 0.0, %v718
    %v720 = vpop.f32.mrb[0].mxu0
    %v721 = vadd.f32 0.0, %v720
    %v722 = vpop.f32.mrb[0].mxu0
    %v723 = vpop.f32.mrb[0].mxu0
    %724 = vdwg.mxu0
    %v725 = vxor.u32 %v678, 2147483648
    %v726 = vmul.f32 %v725, 1.442695
    %v727 = vpow.pop %v726
    %v728 = vadd.f32 %v727, 1.0
    %v729 = vrcp.pop %v728
    %v730 = vmul.f32 1.0, %v729
    %v731 = vxor.u32 %v680, 2147483648
    %v732 = vmul.f32 %v731, 1.442695
    %v733 = vpow.pop %v732
    %v734 = vadd.f32 %v733, 1.0
    %v735 = vrcp.pop %v734
    %v736 = vmul.f32 1.0, %v735
    %v737 = vtanh.pop %v719
    %v738 = vxor.u32 %v721, 2147483648
    %v739 = vmul.f32 %v738, 1.442695
    %v740 = vpow.pop %v739
    %v741 = vadd.f32 %v740, 1.0
    %v742 = vrcp.pop %v741
    %v743 = vmul.f32 1.0, %v742
    %v744 = vmul.f32 %v736, %v637
    %v745 = vmul.f32 %v730, %v737
    %v746 = vadd.f32 %v744, %v745
    %v747 = vtanh.pop %v746
    %v748 = vmul.f32 %v743, %v747
    %s749 = scalar_lea.vmem %s0, 12
    %v750 = vld [vmem:[%s749] sm:$0xf]
    %v751 = vpack.c.bf16 %v748, %v748
    %752 = vmatprep.subr.bf16.mxu0 %v298
    %753 = vmatpush1.bf16.msra.mxu0 %v297
    %754 = vmatprep.subr.bf16.mxu0 %v302
    %755 = vmatpush1.bf16.msra.mxu0 %v301
    %756 = vmatprep.subr.bf16.mxu0 %v306
    %757 = vmatpush1.bf16.msra.mxu0 %v305
    %758 = vmatprep.subr.bf16.mxu0 %v310
    %759 = vmatpush1.bf16.msra.mxu0 %v309
    %760 = vmatprep.subr.bf16.mxu0 %v314
    %761 = vmatpush1.bf16.msra.mxu0 %v313
    %762 = vmatprep.subr.bf16.mxu0 %v318
    %763 = vmatpush1.bf16.msra.mxu0 %v317
    %764 = vmatprep.subr.bf16.mxu0 %v322
    %765 = vmatpush1.bf16.msra.mxu0 %v321
    %766 = vmatprep.subr.bf16.mxu0 %v326
    %767 = vmatpush1.bf16.msra.mxu0 %v325
    %768 = vmatprep.subr.bf16.mxu0 %v330
    %769 = vmatpush1.bf16.msra.mxu0 %v329
    %770 = vmatprep.subr.bf16.mxu0 %v334
    %771 = vmatpush1.bf16.msra.mxu0 %v333
    %772 = vmatprep.subr.bf16.mxu0 %v338
    %773 = vmatpush1.bf16.msra.mxu0 %v337
    %774 = vmatprep.subr.bf16.mxu0 %v342
    %775 = vmatpush1.bf16.msra.mxu0 %v341
    %776 = vmatprep.subr.bf16.mxu0 %v346
    %777 = vmatpush1.bf16.msra.mxu0 %v345
    %778 = vmatprep.subr.bf16.mxu0 %v350
    %779 = vmatpush1.bf16.msra.mxu0 %v349
    %780 = vmatprep.subr.bf16.mxu0 %v354
    %781 = vmatpush1.bf16.msra.mxu0 %v353
    %782 = vmatprep.subr.bf16.mxu0 %v358
    %783 = vmatpush1.bf16.msra.mxu0 %v357
    %784 = vmatprep.mubr.bf16.mxu0 %v751
    %785 = vmatmul.mubr.bf16.gmra.mrb[0].mxu0 %v750
    %v786 = vpop.f32.mrb[0].mxu0
    %v787 = vadd.f32 0.0, %v786
    %v788 = vpop.f32.mrb[0].mxu0
    %v789 = vadd.f32 0.0, %v788
    %v790 = vpop.f32.mrb[0].mxu0
    %v791 = vpop.f32.mrb[0].mxu0
    %792 = vdwg.mxu0
    %793 = vmatprep.subr.bf16.mxu0 %v300
    %794 = vmatpush1.bf16.msra.mxu0 %v299
    %795 = vmatprep.subr.bf16.mxu0 %v304
    %796 = vmatpush1.bf16.msra.mxu0 %v303
    %797 = vmatprep.subr.bf16.mxu0 %v308
    %798 = vmatpush1.bf16.msra.mxu0 %v307
    %799 = vmatprep.subr.bf16.mxu0 %v312
    %800 = vmatpush1.bf16.msra.mxu0 %v311
    %801 = vmatprep.subr.bf16.mxu0 %v316
    %802 = vmatpush1.bf16.msra.mxu0 %v315
    %803 = vmatprep.subr.bf16.mxu0 %v320
    %804 = vmatpush1.bf16.msra.mxu0 %v319
    %805 = vmatprep.subr.bf16.mxu0 %v324
    %806 = vmatpush1.bf16.msra.mxu0 %v323
    %807 = vmatprep.subr.bf16.mxu0 %v328
    %808 = vmatpush1.bf16.msra.mxu0 %v327
    %809 = vmatprep.subr.bf16.mxu0 %v332
    %810 = vmatpush1.bf16.msra.mxu0 %v331
    %811 = vmatprep.subr.bf16.mxu0 %v336
    %812 = vmatpush1.bf16.msra.mxu0 %v335
    %813 = vmatprep.subr.bf16.mxu0 %v340
    %814 = vmatpush1.bf16.msra.mxu0 %v339
    %815 = vmatprep.subr.bf16.mxu0 %v344
    %816 = vmatpush1.bf16.msra.mxu0 %v343
    %817 = vmatprep.subr.bf16.mxu0 %v348
    %818 = vmatpush1.bf16.msra.mxu0 %v347
    %819 = vmatprep.subr.bf16.mxu0 %v352
    %820 = vmatpush1.bf16.msra.mxu0 %v351
    %821 = vmatprep.subr.bf16.mxu0 %v356
    %822 = vmatpush1.bf16.msra.mxu0 %v355
    %823 = vmatprep.subr.bf16.mxu0 %v360
    %824 = vmatpush1.bf16.msra.mxu0 %v359
    %825 = vmatprep.mubr.bf16.mxu0 %v751
    %826 = vmatmul.mubr.bf16.gmra.mrb[0].mxu0 %v750
    %v827 = vpop.f32.mrb[0].mxu0
    %v828 = vadd.f32 0.0, %v827
    %v829 = vpop.f32.mrb[0].mxu0
    %v830 = vadd.f32 0.0, %v829
    %v831 = vpop.f32.mrb[0].mxu0
    %v832 = vpop.f32.mrb[0].mxu0
    %833 = vdwg.mxu0
    %v834 = vxor.u32 %v787, 2147483648
    %v835 = vmul.f32 %v834, 1.442695
    %v836 = vpow.pop %v835
    %v837 = vadd.f32 %v836, 1.0
    %v838 = vrcp.pop %v837
    %v839 = vmul.f32 1.0, %v838
    %v840 = vxor.u32 %v789, 2147483648
    %v841 = vmul.f32 %v840, 1.442695
    %v842 = vpow.pop %v841
    %v843 = vadd.f32 %v842, 1.0
    %v844 = vrcp.pop %v843
    %v845 = vmul.f32 1.0, %v844
    %v846 = vtanh.pop %v828
    %v847 = vxor.u32 %v830, 2147483648
    %v848 = vmul.f32 %v847, 1.442695
    %v849 = vpow.pop %v848
    %v850 = vadd.f32 %v849, 1.0
    %v851 = vrcp.pop %v850
    %v852 = vmul.f32 1.0, %v851
    %v853 = vmul.f32 %v845, %v746
    %v854 = vmul.f32 %v839, %v846
    %v855 = vadd.f32 %v853, %v854
    %v856 = vtanh.pop %v855
    %v857 = vmul.f32 %v852, %v856
    %s858 = scalar_lea.vmem %s0, 16
    %v859 = vld [vmem:[%s858] sm:$0xf]
    %v860 = vpack.c.bf16 %v857, %v857
    %861 = vmatprep.subr.bf16.mxu0 %v298
    %862 = vmatpush1.bf16.msra.mxu0 %v297
    %863 = vmatprep.subr.bf16.mxu0 %v302
    %864 = vmatpush1.bf16.msra.mxu0 %v301
    %865 = vmatprep.subr.bf16.mxu0 %v306
    %866 = vmatpush1.bf16.msra.mxu0 %v305
    %867 = vmatprep.subr.bf16.mxu0 %v310
    %868 = vmatpush1.bf16.msra.mxu0 %v309
    %869 = vmatprep.subr.bf16.mxu0 %v314
    %870 = vmatpush1.bf16.msra.mxu0 %v313
    %871 = vmatprep.subr.bf16.mxu0 %v318
    %872 = vmatpush1.bf16.msra.mxu0 %v317
    %873 = vmatprep.subr.bf16.mxu0 %v322
    %874 = vmatpush1.bf16.msra.mxu0 %v321
    %875 = vmatprep.subr.bf16.mxu0 %v326
    %876 = vmatpush1.bf16.msra.mxu0 %v325
    %877 = vmatprep.subr.bf16.mxu0 %v330
    %878 = vmatpush1.bf16.msra.mxu0 %v329
    %879 = vmatprep.subr.bf16.mxu0 %v334
    %880 = vmatpush1.bf16.msra.mxu0 %v333
    %881 = vmatprep.subr.bf16.mxu0 %v338
    %882 = vmatpush1.bf16.msra.mxu0 %v337
    %883 = vmatprep.subr.bf16.mxu0 %v342
    %884 = vmatpush1.bf16.msra.mxu0 %v341
    %885 = vmatprep.subr.bf16.mxu0 %v346
    %886 = vmatpush1.bf16.msra.mxu0 %v345
    %887 = vmatprep.subr.bf16.mxu0 %v350
    %888 = vmatpush1.bf16.msra.mxu0 %v349
    %889 = vmatprep.subr.bf16.mxu0 %v354
    %890 = vmatpush1.bf16.msra.mxu0 %v353
    %891 = vmatprep.subr.bf16.mxu0 %v358
    %892 = vmatpush1.bf16.msra.mxu0 %v357
    %893 = vmatprep.mubr.bf16.mxu0 %v860
    %894 = vmatmul.mubr.bf16.gmra.mrb[0].mxu0 %v859
    %v895 = vpop.f32.mrb[0].mxu0
    %v896 = vadd.f32 0.0, %v895
    %v897 = vpop.f32.mrb[0].mxu0
    %v898 = vadd.f32 0.0, %v897
    %v899 = vpop.f32.mrb[0].mxu0
    %v900 = vpop.f32.mrb[0].mxu0
    %901 = vdwg.mxu0
    %902 = vmatprep.subr.bf16.mxu0 %v300
    %903 = vmatpush1.bf16.msra.mxu0 %v299
    %904 = vmatprep.subr.bf16.mxu0 %v304
    %905 = vmatpush1.bf16.msra.mxu0 %v303
    %906 = vmatprep.subr.bf16.mxu0 %v308
    %907 = vmatpush1.bf16.msra.mxu0 %v307
    %908 = vmatprep.subr.bf16.mxu0 %v312
    %909 = vmatpush1.bf16.msra.mxu0 %v311
    %910 = vmatprep.subr.bf16.mxu0 %v316
    %911 = vmatpush1.bf16.msra.mxu0 %v315
    %912 = vmatprep.subr.bf16.mxu0 %v320
    %913 = vmatpush1.bf16.msra.mxu0 %v319
    %914 = vmatprep.subr.bf16.mxu0 %v324
    %915 = vmatpush1.bf16.msra.mxu0 %v323
    %916 = vmatprep.subr.bf16.mxu0 %v328
    %917 = vmatpush1.bf16.msra.mxu0 %v327
    %918 = vmatprep.subr.bf16.mxu0 %v332
    %919 = vmatpush1.bf16.msra.mxu0 %v331
    %920 = vmatprep.subr.bf16.mxu0 %v336
    %921 = vmatpush1.bf16.msra.mxu0 %v335
    %922 = vmatprep.subr.bf16.mxu0 %v340
    %923 = vmatpush1.bf16.msra.mxu0 %v339
    %924 = vmatprep.subr.bf16.mxu0 %v344
    %925 = vmatpush1.bf16.msra.mxu0 %v343
    %926 = vmatprep.subr.bf16.mxu0 %v348
    %927 = vmatpush1.bf16.msra.mxu0 %v347
    %928 = vmatprep.subr.bf16.mxu0 %v352
    %929 = vmatpush1.bf16.msra.mxu0 %v351
    %930 = vmatprep.subr.bf16.mxu0 %v356
    %931 = vmatpush1.bf16.msra.mxu0 %v355
    %932 = vmatprep.subr.bf16.mxu0 %v360
    %933 = vmatpush1.bf16.msra.mxu0 %v359
    %934 = vmatprep.mubr.bf16.mxu0 %v860
    %935 = vmatmul.mubr.bf16.gmra.mrb[0].mxu0 %v859
    %v936 = vpop.f32.mrb[0].mxu0
    %v937 = vadd.f32 0.0, %v936
    %v938 = vpop.f32.mrb[0].mxu0
    %v939 = vadd.f32 0.0, %v938
    %v940 = vpop.f32.mrb[0].mxu0
    %v941 = vpop.f32.mrb[0].mxu0
    %942 = vdwg.mxu0
    %v943 = vxor.u32 %v896, 2147483648
    %v944 = vmul.f32 %v943, 1.442695
    %v945 = vpow.pop %v944
    %v946 = vadd.f32 %v945, 1.0
    %v947 = vrcp.pop %v946
    %v948 = vmul.f32 1.0, %v947
    %v949 = vxor.u32 %v898, 2147483648
    %v950 = vmul.f32 %v949, 1.442695
    %v951 = vpow.pop %v950
    %v952 = vadd.f32 %v951, 1.0
    %v953 = vrcp.pop %v952
    %v954 = vmul.f32 1.0, %v953
    %v955 = vtanh.pop %v937
    %v956 = vxor.u32 %v939, 2147483648
    %v957 = vmul.f32 %v956, 1.442695
    %v958 = vpow.pop %v957
    %v959 = vadd.f32 %v958, 1.0
    %v960 = vrcp.pop %v959
    %v961 = vmul.f32 1.0, %v960
    %v962 = vmul.f32 %v954, %v855
    %v963 = vmul.f32 %v948, %v955
    %v964 = vadd.f32 %v962, %v963
    %v965 = vtanh.pop %v964
    %v966 = vmul.f32 %v961, %v965
    %s967 = scalar_lea.vmem %s0, 20
    %v968 = vld [vmem:[%s967] sm:$0xf]
    %v969 = vpack.c.bf16 %v966, %v966
    %970 = vmatprep.subr.bf16.mxu0 %v298
    %971 = vmatpush1.bf16.msra.mxu0 %v297
    %972 = vmatprep.subr.bf16.mxu0 %v302
    %973 = vmatpush1.bf16.msra.mxu0 %v301
    %974 = vmatprep.subr.bf16.mxu0 %v306
    %975 = vmatpush1.bf16.msra.mxu0 %v305
    %976 = vmatprep.subr.bf16.mxu0 %v310
    %977 = vmatpush1.bf16.msra.mxu0 %v309
    %978 = vmatprep.subr.bf16.mxu0 %v314
    %979 = vmatpush1.bf16.msra.mxu0 %v313
    %980 = vmatprep.subr.bf16.mxu0 %v318
    %981 = vmatpush1.bf16.msra.mxu0 %v317
    %982 = vmatprep.subr.bf16.mxu0 %v322
    %983 = vmatpush1.bf16.msra.mxu0 %v321
    %984 = vmatprep.subr.bf16.mxu0 %v326
    %985 = vmatpush1.bf16.msra.mxu0 %v325
    %986 = vmatprep.subr.bf16.mxu0 %v330
    %987 = vmatpush1.bf16.msra.mxu0 %v329
    %988 = vmatprep.subr.bf16.mxu0 %v334
    %989 = vmatpush1.bf16.msra.mxu0 %v333
    %990 = vmatprep.subr.bf16.mxu0 %v338
    %991 = vmatpush1.bf16.msra.mxu0 %v337
    %992 = vmatprep.subr.bf16.mxu0 %v342
    %993 = vmatpush1.bf16.msra.mxu0 %v341
    %994 = vmatprep.subr.bf16.mxu0 %v346
    %995 = vmatpush1.bf16.msra.mxu0 %v345
    %996 = vmatprep.subr.bf16.mxu0 %v350
    %997 = vmatpush1.bf16.msra.mxu0 %v349
    %998 = vmatprep.subr.bf16.mxu0 %v354
    %999 = vmatpush1.bf16.msra.mxu0 %v353
    %1000 = vmatprep.subr.bf16.mxu0 %v358
    %1001 = vmatpush1.bf16.msra.mxu0 %v357
    %1002 = vmatprep.mubr.bf16.mxu0 %v969
    %1003 = vmatmul.mubr.bf16.gmra.mrb[0].mxu0 %v968
    %v1004 = vpop.f32.mrb[0].mxu0
    %v1005 = vadd.f32 0.0, %v1004
    %v1006 = vpop.f32.mrb[0].mxu0
    %v1007 = vadd.f32 0.0, %v1006
    %v1008 = vpop.f32.mrb[0].mxu0
    %v1009 = vpop.f32.mrb[0].mxu0
    %1010 = vdwg.mxu0
    %1011 = vmatprep.subr.bf16.mxu0 %v300
    %1012 = vmatpush1.bf16.msra.mxu0 %v299
    %1013 = vmatprep.subr.bf16.mxu0 %v304
    %1014 = vmatpush1.bf16.msra.mxu0 %v303
    %1015 = vmatprep.subr.bf16.mxu0 %v308
    %1016 = vmatpush1.bf16.msra.mxu0 %v307
    %1017 = vmatprep.subr.bf16.mxu0 %v312
    %1018 = vmatpush1.bf16.msra.mxu0 %v311
    %1019 = vmatprep.subr.bf16.mxu0 %v316
    %1020 = vmatpush1.bf16.msra.mxu0 %v315
    %1021 = vmatprep.subr.bf16.mxu0 %v320
    %1022 = vmatpush1.bf16.msra.mxu0 %v319
    %1023 = vmatprep.subr.bf16.mxu0 %v324
    %1024 = vmatpush1.bf16.msra.mxu0 %v323
    %1025 = vmatprep.subr.bf16.mxu0 %v328
    %1026 = vmatpush1.bf16.msra.mxu0 %v327
    %1027 = vmatprep.subr.bf16.mxu0 %v332
    %1028 = vmatpush1.bf16.msra.mxu0 %v331
    %1029 = vmatprep.subr.bf16.mxu0 %v336
    %1030 = vmatpush1.bf16.msra.mxu0 %v335
    %1031 = vmatprep.subr.bf16.mxu0 %v340
    %1032 = vmatpush1.bf16.msra.mxu0 %v339
    %1033 = vmatprep.subr.bf16.mxu0 %v344
    %1034 = vmatpush1.bf16.msra.mxu0 %v343
    %1035 = vmatprep.subr.bf16.mxu0 %v348
    %1036 = vmatpush1.bf16.msra.mxu0 %v347
    %1037 = vmatprep.subr.bf16.mxu0 %v352
    %1038 = vmatpush1.bf16.msra.mxu0 %v351
    %1039 = vmatprep.subr.bf16.mxu0 %v356
    %1040 = vmatpush1.bf16.msra.mxu0 %v355
    %1041 = vmatprep.subr.bf16.mxu0 %v360
    %1042 = vmatpush1.bf16.msra.mxu0 %v359
    %1043 = vmatprep.mubr.bf16.mxu0 %v969
    %1044 = vmatmul.mubr.bf16.gmra.mrb[0].mxu0 %v968
    %v1045 = vpop.f32.mrb[0].mxu0
    %v1046 = vadd.f32 0.0, %v1045
    %v1047 = vpop.f32.mrb[0].mxu0
    %v1048 = vadd.f32 0.0, %v1047
    %v1049 = vpop.f32.mrb[0].mxu0
    %v1050 = vpop.f32.mrb[0].mxu0
    %1051 = vdwg.mxu0
    %v1052 = vxor.u32 %v1005, 2147483648
    %v1053 = vmul.f32 %v1052, 1.442695
    %v1054 = vpow.pop %v1053
    %v1055 = vadd.f32 %v1054, 1.0
    %v1056 = vrcp.pop %v1055
    %v1057 = vmul.f32 1.0, %v1056
    %v1058 = vxor.u32 %v1007, 2147483648
    %v1059 = vmul.f32 %v1058, 1.442695
    %v1060 = vpow.pop %v1059
    %v1061 = vadd.f32 %v1060, 1.0
    %v1062 = vrcp.pop %v1061
    %v1063 = vmul.f32 1.0, %v1062
    %v1064 = vtanh.pop %v1046
    %v1065 = vxor.u32 %v1048, 2147483648
    %v1066 = vmul.f32 %v1065, 1.442695
    %v1067 = vpow.pop %v1066
    %v1068 = vadd.f32 %v1067, 1.0
    %v1069 = vrcp.pop %v1068
    %v1070 = vmul.f32 1.0, %v1069
    %v1071 = vmul.f32 %v1063, %v964
    %v1072 = vmul.f32 %v1057, %v1064
    %v1073 = vadd.f32 %v1071, %v1072
    %v1074 = vtanh.pop %v1073
    %v1075 = vmul.f32 %v1070, %v1074
    %s1076 = scalar_lea.vmem %s0, 24
    %v1077 = vld [vmem:[%s1076] sm:$0xf]
    %v1078 = vpack.c.bf16 %v1075, %v1075
    %1079 = vmatprep.subr.bf16.mxu0 %v298
    %1080 = vmatpush1.bf16.msra.mxu0 %v297
    %1081 = vmatprep.subr.bf16.mxu0 %v302
    %1082 = vmatpush1.bf16.msra.mxu0 %v301
    %1083 = vmatprep.subr.bf16.mxu0 %v306
    %1084 = vmatpush1.bf16.msra.mxu0 %v305
    %1085 = vmatprep.subr.bf16.mxu0 %v310
    %1086 = vmatpush1.bf16.msra.mxu0 %v309
    %1087 = vmatprep.subr.bf16.mxu0 %v314
    %1088 = vmatpush1.bf16.msra.mxu0 %v313
    %1089 = vmatprep.subr.bf16.mxu0 %v318
    %1090 = vmatpush1.bf16.msra.mxu0 %v317
    %1091 = vmatprep.subr.bf16.mxu0 %v322
    %1092 = vmatpush1.bf16.msra.mxu0 %v321
    %1093 = vmatprep.subr.bf16.mxu0 %v326
    %1094 = vmatpush1.bf16.msra.mxu0 %v325
    %1095 = vmatprep.subr.bf16.mxu0 %v330
    %1096 = vmatpush1.bf16.msra.mxu0 %v329
    %1097 = vmatprep.subr.bf16.mxu0 %v334
    %1098 = vmatpush1.bf16.msra.mxu0 %v333
    %1099 = vmatprep.subr.bf16.mxu0 %v338
    %1100 = vmatpush1.bf16.msra.mxu0 %v337
    %1101 = vmatprep.subr.bf16.mxu0 %v342
    %1102 = vmatpush1.bf16.msra.mxu0 %v341
    %1103 = vmatprep.subr.bf16.mxu0 %v346
    %1104 = vmatpush1.bf16.msra.mxu0 %v345
    %1105 = vmatprep.subr.bf16.mxu0 %v350
    %1106 = vmatpush1.bf16.msra.mxu0 %v349
    %1107 = vmatprep.subr.bf16.mxu0 %v354
    %1108 = vmatpush1.bf16.msra.mxu0 %v353
    %1109 = vmatprep.subr.bf16.mxu0 %v358
    %1110 = vmatpush1.bf16.msra.mxu0 %v357
    %1111 = vmatprep.mubr.bf16.mxu0 %v1078
    %1112 = vmatmul.mubr.bf16.gmra.mrb[0].mxu0 %v1077
    %v1113 = vpop.f32.mrb[0].mxu0
    %v1114 = vadd.f32 0.0, %v1113
    %v1115 = vpop.f32.mrb[0].mxu0
    %v1116 = vadd.f32 0.0, %v1115
    %v1117 = vpop.f32.mrb[0].mxu0
    %v1118 = vpop.f32.mrb[0].mxu0
    %1119 = vdwg.mxu0
    %1120 = vmatprep.subr.bf16.mxu0 %v300
    %1121 = vmatpush1.bf16.msra.mxu0 %v299
    %1122 = vmatprep.subr.bf16.mxu0 %v304
    %1123 = vmatpush1.bf16.msra.mxu0 %v303
    %1124 = vmatprep.subr.bf16.mxu0 %v308
    %1125 = vmatpush1.bf16.msra.mxu0 %v307
    %1126 = vmatprep.subr.bf16.mxu0 %v312
    %1127 = vmatpush1.bf16.msra.mxu0 %v311
    %1128 = vmatprep.subr.bf16.mxu0 %v316
    %1129 = vmatpush1.bf16.msra.mxu0 %v315
    %1130 = vmatprep.subr.bf16.mxu0 %v320
    %1131 = vmatpush1.bf16.msra.mxu0 %v319
    %1132 = vmatprep.subr.bf16.mxu0 %v324
    %1133 = vmatpush1.bf16.msra.mxu0 %v323
    %1134 = vmatprep.subr.bf16.mxu0 %v328
    %1135 = vmatpush1.bf16.msra.mxu0 %v327
    %1136 = vmatprep.subr.bf16.mxu0 %v332
    %1137 = vmatpush1.bf16.msra.mxu0 %v331
    %1138 = vmatprep.subr.bf16.mxu0 %v336
    %1139 = vmatpush1.bf16.msra.mxu0 %v335
    %1140 = vmatprep.subr.bf16.mxu0 %v340
    %1141 = vmatpush1.bf16.msra.mxu0 %v339
    %1142 = vmatprep.subr.bf16.mxu0 %v344
    %1143 = vmatpush1.bf16.msra.mxu0 %v343
    %1144 = vmatprep.subr.bf16.mxu0 %v348
    %1145 = vmatpush1.bf16.msra.mxu0 %v347
    %1146 = vmatprep.subr.bf16.mxu0 %v352
    %1147 = vmatpush1.bf16.msra.mxu0 %v351
    %1148 = vmatprep.subr.bf16.mxu0 %v356
    %1149 = vmatpush1.bf16.msra.mxu0 %v355
    %1150 = vmatprep.subr.bf16.mxu0 %v360
    %1151 = vmatpush1.bf16.msra.mxu0 %v359
    %1152 = vmatprep.mubr.bf16.mxu0 %v1078
    %1153 = vmatmul.mubr.bf16.gmra.mrb[0].mxu0 %v1077
    %v1154 = vpop.f32.mrb[0].mxu0
    %v1155 = vadd.f32 0.0, %v1154
    %v1156 = vpop.f32.mrb[0].mxu0
    %v1157 = vadd.f32 0.0, %v1156
    %v1158 = vpop.f32.mrb[0].mxu0
    %v1159 = vpop.f32.mrb[0].mxu0
    %1160 = vdwg.mxu0
    %v1161 = vxor.u32 %v1114, 2147483648
    %v1162 = vmul.f32 %v1161, 1.442695
    %v1163 = vpow.pop %v1162
    %v1164 = vadd.f32 %v1163, 1.0
    %v1165 = vrcp.pop %v1164
    %v1166 = vmul.f32 1.0, %v1165
    %v1167 = vxor.u32 %v1116, 2147483648
    %v1168 = vmul.f32 %v1167, 1.442695
    %v1169 = vpow.pop %v1168
    %v1170 = vadd.f32 %v1169, 1.0
    %v1171 = vrcp.pop %v1170
    %v1172 = vmul.f32 1.0, %v1171
    %v1173 = vtanh.pop %v1155
    %v1174 = vxor.u32 %v1157, 2147483648
    %v1175 = vmul.f32 %v1174, 1.442695
    %v1176 = vpow.pop %v1175
    %v1177 = vadd.f32 %v1176, 1.0
    %v1178 = vrcp.pop %v1177
    %v1179 = vmul.f32 1.0, %v1178
    %v1180 = vmul.f32 %v1172, %v1073
    %v1181 = vmul.f32 %v1166, %v1173
    %v1182 = vadd.f32 %v1180, %v1181
    %v1183 = vtanh.pop %v1182
    %v1184 = vmul.f32 %v1179, %v1183
    %s1185 = scalar_lea.vmem %s0, 28
    %v1186 = vld [vmem:[%s1185] sm:$0xf]
    %v1187 = vpack.c.bf16 %v1184, %v1184
    %1188 = vmatprep.subr.bf16.mxu0 %v298
    %1189 = vmatpush1.bf16.msra.mxu0 %v297
    %1190 = vmatprep.subr.bf16.mxu0 %v302
    %1191 = vmatpush1.bf16.msra.mxu0 %v301
    %1192 = vmatprep.subr.bf16.mxu0 %v306
    %1193 = vmatpush1.bf16.msra.mxu0 %v305
    %1194 = vmatprep.subr.bf16.mxu0 %v310
    %1195 = vmatpush1.bf16.msra.mxu0 %v309
    %1196 = vmatprep.subr.bf16.mxu0 %v314
    %1197 = vmatpush1.bf16.msra.mxu0 %v313
    %1198 = vmatprep.subr.bf16.mxu0 %v318
    %1199 = vmatpush1.bf16.msra.mxu0 %v317
    %1200 = vmatprep.subr.bf16.mxu0 %v322
    %1201 = vmatpush1.bf16.msra.mxu0 %v321
    %1202 = vmatprep.subr.bf16.mxu0 %v326
    %1203 = vmatpush1.bf16.msra.mxu0 %v325
    %1204 = vmatprep.subr.bf16.mxu0 %v330
    %1205 = vmatpush1.bf16.msra.mxu0 %v329
    %1206 = vmatprep.subr.bf16.mxu0 %v334
    %1207 = vmatpush1.bf16.msra.mxu0 %v333
    %1208 = vmatprep.subr.bf16.mxu0 %v338
    %1209 = vmatpush1.bf16.msra.mxu0 %v337
    %1210 = vmatprep.subr.bf16.mxu0 %v342
    %1211 = vmatpush1.bf16.msra.mxu0 %v341
    %1212 = vmatprep.subr.bf16.mxu0 %v346
    %1213 = vmatpush1.bf16.msra.mxu0 %v345
    %1214 = vmatprep.subr.bf16.mxu0 %v350
    %1215 = vmatpush1.bf16.msra.mxu0 %v349
    %1216 = vmatprep.subr.bf16.mxu0 %v354
    %1217 = vmatpush1.bf16.msra.mxu0 %v353
    %1218 = vmatprep.subr.bf16.mxu0 %v358
    %1219 = vmatpush1.bf16.msra.mxu0 %v357
    %1220 = vmatprep.mubr.bf16.mxu0 %v1187
    %1221 = vmatmul.mubr.bf16.gmra.mrb[0].mxu0 %v1186
    %v1222 = vpop.f32.mrb[0].mxu0
    %v1223 = vadd.f32 0.0, %v1222
    %v1224 = vpop.f32.mrb[0].mxu0
    %v1225 = vadd.f32 0.0, %v1224
    %v1226 = vpop.f32.mrb[0].mxu0
    %v1227 = vpop.f32.mrb[0].mxu0
    %1228 = vdwg.mxu0
    %1229 = vmatprep.subr.bf16.mxu0 %v300
    %1230 = vmatpush1.bf16.msra.mxu0 %v299
    %1231 = vmatprep.subr.bf16.mxu0 %v304
    %1232 = vmatpush1.bf16.msra.mxu0 %v303
    %1233 = vmatprep.subr.bf16.mxu0 %v308
    %1234 = vmatpush1.bf16.msra.mxu0 %v307
    %1235 = vmatprep.subr.bf16.mxu0 %v312
    %1236 = vmatpush1.bf16.msra.mxu0 %v311
    %1237 = vmatprep.subr.bf16.mxu0 %v316
    %1238 = vmatpush1.bf16.msra.mxu0 %v315
    %1239 = vmatprep.subr.bf16.mxu0 %v320
    %1240 = vmatpush1.bf16.msra.mxu0 %v319
    %1241 = vmatprep.subr.bf16.mxu0 %v324
    %1242 = vmatpush1.bf16.msra.mxu0 %v323
    %1243 = vmatprep.subr.bf16.mxu0 %v328
    %1244 = vmatpush1.bf16.msra.mxu0 %v327
    %1245 = vmatprep.subr.bf16.mxu0 %v332
    %1246 = vmatpush1.bf16.msra.mxu0 %v331
    %1247 = vmatprep.subr.bf16.mxu0 %v336
    %1248 = vmatpush1.bf16.msra.mxu0 %v335
    %1249 = vmatprep.subr.bf16.mxu0 %v340
    %1250 = vmatpush1.bf16.msra.mxu0 %v339
    %1251 = vmatprep.subr.bf16.mxu0 %v344
    %1252 = vmatpush1.bf16.msra.mxu0 %v343
    %1253 = vmatprep.subr.bf16.mxu0 %v348
    %1254 = vmatpush1.bf16.msra.mxu0 %v347
    %1255 = vmatprep.subr.bf16.mxu0 %v352
    %1256 = vmatpush1.bf16.msra.mxu0 %v351
    %1257 = vmatprep.subr.bf16.mxu0 %v356
    %1258 = vmatpush1.bf16.msra.mxu0 %v355
    %1259 = vmatprep.subr.bf16.mxu0 %v360
    %1260 = vmatpush1.bf16.msra.mxu0 %v359
    %1261 = vmatprep.mubr.bf16.mxu0 %v1187
    %1262 = vmatmul.mubr.bf16.gmra.mrb[0].mxu0 %v1186
    %v1263 = vpop.f32.mrb[0].mxu0
    %v1264 = vadd.f32 0.0, %v1263
    %v1265 = vpop.f32.mrb[0].mxu0
    %v1266 = vadd.f32 0.0, %v1265
    %v1267 = vpop.f32.mrb[0].mxu0
    %v1268 = vpop.f32.mrb[0].mxu0
    %1269 = vdwg.mxu0
    %v1270 = vxor.u32 %v1223, 2147483648
    %v1271 = vmul.f32 %v1270, 1.442695
    %v1272 = vpow.pop %v1271
    %v1273 = vadd.f32 %v1272, 1.0
    %v1274 = vrcp.pop %v1273
    %v1275 = vmul.f32 1.0, %v1274
    %v1276 = vxor.u32 %v1225, 2147483648
    %v1277 = vmul.f32 %v1276, 1.442695
    %v1278 = vpow.pop %v1277
    %v1279 = vadd.f32 %v1278, 1.0
    %v1280 = vrcp.pop %v1279
    %v1281 = vmul.f32 1.0, %v1280
    %v1282 = vtanh.pop %v1264
    %v1283 = vxor.u32 %v1266, 2147483648
    %v1284 = vmul.f32 %v1283, 1.442695
    %v1285 = vpow.pop %v1284
    %v1286 = vadd.f32 %v1285, 1.0
    %v1287 = vrcp.pop %v1286
    %v1288 = vmul.f32 1.0, %v1287
    %v1289 = vmul.f32 %v1281, %v1182
    %v1290 = vmul.f32 %v1275, %v1282
    %v1291 = vadd.f32 %v1289, %v1290
    %v1292 = vtanh.pop %v1291
    %v1293 = vmul.f32 %v1288, %v1292
    %v1294 = vld [vmem:[%s2] sm:$0xff]
    %v1295 = vld [vmem:[%s2 + $0x8] sm:$0xff]
    %v1296 = vld [vmem:[%s2 + $0x10] sm:$0xff]
    %v1297 = vld [vmem:[%s2 + $0x18] sm:$0xff]
    %v1298 = vld [vmem:[%s2 + $0x20] sm:$0xff]
    %v1299 = vld [vmem:[%s2 + $0x28] sm:$0xff]
    %v1300 = vld [vmem:[%s2 + $0x30] sm:$0xff]
    %v1301 = vld [vmem:[%s2 + $0x38] sm:$0xff]
    %v1302 = vld [vmem:[%s2 + $0x40] sm:$0xff]
    %v1303 = vld [vmem:[%s2 + $0x48] sm:$0xff]
    %v1304 = vld [vmem:[%s2 + $0x50] sm:$0xff]
    %v1305 = vld [vmem:[%s2 + $0x58] sm:$0xff]
    %v1306 = vld [vmem:[%s2 + $0x60] sm:$0xff]
    %v1307 = vld [vmem:[%s2 + $0x68] sm:$0xff]
    %v1308 = vld [vmem:[%s2 + $0x70] sm:$0xff]
    %v1309 = vld [vmem:[%s2 + $0x78] sm:$0xff]
    %v1310 = vld [vmem:[%s3] sm:$0x1]
    %v1312 = vlaneseq
    %v1313 = vshrl.u32 %v1312, 7
    %v1314 = vsub.s32 0, %v1313
    %v1315 = vrot.slane %v1310, %v1314
    %1317 = vmatprep.subr.mxu0 0.0
    %1318 = vmatpush1.msra.mxu0 %v1294
    %1319 = vmatprep.subr.mxu0 0.0
    %1320 = vmatpush1.msra.mxu0 %v1295
    %1321 = vmatprep.subr.mxu0 0.0
    %1322 = vmatpush1.msra.mxu0 %v1296
    %1323 = vmatprep.subr.mxu0 0.0
    %1324 = vmatpush1.msra.mxu0 %v1297
    %1325 = vmatprep.subr.mxu0 0.0
    %1326 = vmatpush1.msra.mxu0 %v1298
    %1327 = vmatprep.subr.mxu0 0.0
    %1328 = vmatpush1.msra.mxu0 %v1299
    %1329 = vmatprep.subr.mxu0 0.0
    %1330 = vmatpush1.msra.mxu0 %v1300
    %1331 = vmatprep.subr.mxu0 0.0
    %1332 = vmatpush1.msra.mxu0 %v1301
    %1333 = vmatprep.subr.mxu0 0.0
    %1334 = vmatpush1.msra.mxu0 %v1302
    %1335 = vmatprep.subr.mxu0 0.0
    %1336 = vmatpush1.msra.mxu0 %v1303
    %1337 = vmatprep.subr.mxu0 0.0
    %1338 = vmatpush1.msra.mxu0 %v1304
    %1339 = vmatprep.subr.mxu0 0.0
    %1340 = vmatpush1.msra.mxu0 %v1305
    %1341 = vmatprep.subr.mxu0 0.0
    %1342 = vmatpush1.msra.mxu0 %v1306
    %1343 = vmatprep.subr.mxu0 0.0
    %1344 = vmatpush1.msra.mxu0 %v1307
    %1345 = vmatprep.subr.mxu0 0.0
    %1346 = vmatpush1.msra.mxu0 %v1308
    %1347 = vmatprep.subr.mxu0 0.0
    %1348 = vmatpush1.msra.mxu0 %v1309
    %1349 = vmatprep.subr.mxu0 0.0
    %1350 = vmatpush1.msra.mxu0 0.0
    %1351 = vmatprep.subr.mxu0 0.0
    %1352 = vmatpush1.msra.mxu0 0.0
    %1353 = vmatprep.subr.mxu0 0.0
    %1354 = vmatpush1.msra.mxu0 0.0
    %1355 = vmatprep.subr.mxu0 0.0
    %1356 = vmatpush1.msra.mxu0 0.0
    %1357 = vmatprep.subr.mxu0 0.0
    %1358 = vmatpush1.msra.mxu0 0.0
    %1359 = vmatprep.subr.mxu0 0.0
    %1360 = vmatpush1.msra.mxu0 0.0
    %1361 = vmatprep.subr.mxu0 0.0
    %1362 = vmatpush1.msra.mxu0 0.0
    %1363 = vmatprep.subr.mxu0 0.0
    %1364 = vmatpush1.msra.mxu0 0.0
    %1365 = vmatprep.subr.mxu0 0.0
    %1366 = vmatpush1.msra.mxu0 0.0
    %1367 = vmatprep.subr.mxu0 0.0
    %1368 = vmatpush1.msra.mxu0 0.0
    %1369 = vmatprep.subr.mxu0 0.0
    %1370 = vmatpush1.msra.mxu0 0.0
    %1371 = vmatprep.subr.mxu0 0.0
    %1372 = vmatpush1.msra.mxu0 0.0
    %1373 = vmatprep.subr.mxu0 0.0
    %1374 = vmatpush1.msra.mxu0 0.0
    %1375 = vmatprep.subr.mxu0 0.0
    %1376 = vmatpush1.msra.mxu0 0.0
    %1377 = vmatprep.subr.mxu0 0.0
    %1378 = vmatpush1.msra.mxu0 0.0
    %1379 = vmatprep.subr.mxu0 0.0
    %1380 = vmatpush1.msra.mxu0 0.0
    %1381 = vmatprep.mubr.f32.mxu0 0.0
    %1382 = vmatmul.mubr.f32.gmra.mrb[0].mxu0 %v1293
    %v1383 = vpop.f32.mrb[0].mxu0
    %v1384 = vadd.f32 %v1315, %v1383
    %v1385 = vpop.f32.mrb[0].mxu0
    %1386 = vdwg.mxu0
    %v1387 = vmax.f32 %v1384, 0.0
    %v1388 = vld [vmem:[%s4] sm:$0x1]
    %v1389 = vld [vmem:[#allocation2] sm:$0x1]
    %1391 = vset.pattern.permute.xlu0 0
    %1392 = vperm.xlu0 %1391, %v1389
    %v1393 = vpop.permute.xlu0 %1392
    %v1395 = vlaneseq
    %v1396 = vshrl.u32 %v1395, 7
    %v1397 = vsub.s32 0, %v1396
    %v1398 = vrot.slane %v1393, %v1397
    %vm1399 = vcmask 523264
    %v1401 = vsel %vm1399, %v1388, 0
    %v1404 = vsel %vm1399, %v1387, 0
    %1406 = vmatprep.subr.mxu0 0.0
    %1407 = vmatpush1.xpose.msra.mxu0 %v1404
    %1408 = vmatprep.subr.mxu0 0.0
    %1409 = vmatpush1.xpose.msra.mxu0 0.0
    %1410 = vmatprep.subr.mxu0 0.0
    %1411 = vmatpush1.xpose.msra.mxu0 0.0
    %1412 = vmatprep.subr.mxu0 0.0
    %1413 = vmatpush1.xpose.msra.mxu0 0.0
    %1414 = vmatprep.subr.mxu0 0.0
    %1415 = vmatpush1.xpose.msra.mxu0 0.0
    %1416 = vmatprep.subr.mxu0 0.0
    %1417 = vmatpush1.xpose.msra.mxu0 0.0
    %1418 = vmatprep.subr.mxu0 0.0
    %1419 = vmatpush1.xpose.msra.mxu0 0.0
    %1420 = vmatprep.subr.mxu0 0.0
    %1421 = vmatpush1.xpose.msra.mxu0 0.0
    %1422 = vmatprep.subr.mxu0 0.0
    %1423 = vmatpush1.xpose.msra.mxu0 0.0
    %1424 = vmatprep.subr.mxu0 0.0
    %1425 = vmatpush1.xpose.msra.mxu0 0.0
    %1426 = vmatprep.subr.mxu0 0.0
    %1427 = vmatpush1.xpose.msra.mxu0 0.0
    %1428 = vmatprep.subr.mxu0 0.0
    %1429 = vmatpush1.xpose.msra.mxu0 0.0
    %1430 = vmatprep.subr.mxu0 0.0
    %1431 = vmatpush1.xpose.msra.mxu0 0.0
    %1432 = vmatprep.subr.mxu0 0.0
    %1433 = vmatpush1.xpose.msra.mxu0 0.0
    %1434 = vmatprep.subr.mxu0 0.0
    %1435 = vmatpush1.xpose.msra.mxu0 0.0
    %1436 = vmatprep.subr.mxu0 0.0
    %1437 = vmatpush1.xpose.msra.mxu0 0.0
    %1438 = vmatprep.subr.mxu0 0.0
    %1439 = vmatpush1.xpose.msra.mxu0 0.0
    %1440 = vmatprep.subr.mxu0 0.0
    %1441 = vmatpush1.xpose.msra.mxu0 0.0
    %1442 = vmatprep.subr.mxu0 0.0
    %1443 = vmatpush1.xpose.msra.mxu0 0.0
    %1444 = vmatprep.subr.mxu0 0.0
    %1445 = vmatpush1.xpose.msra.mxu0 0.0
    %1446 = vmatprep.subr.mxu0 0.0
    %1447 = vmatpush1.xpose.msra.mxu0 0.0
    %1448 = vmatprep.subr.mxu0 0.0
    %1449 = vmatpush1.xpose.msra.mxu0 0.0
    %1450 = vmatprep.subr.mxu0 0.0
    %1451 = vmatpush1.xpose.msra.mxu0 0.0
    %1452 = vmatprep.subr.mxu0 0.0
    %1453 = vmatpush1.xpose.msra.mxu0 0.0
    %1454 = vmatprep.subr.mxu0 0.0
    %1455 = vmatpush1.xpose.msra.mxu0 0.0
    %1456 = vmatprep.subr.mxu0 0.0
    %1457 = vmatpush1.xpose.msra.mxu0 0.0
    %1458 = vmatprep.subr.mxu0 0.0
    %1459 = vmatpush1.xpose.msra.mxu0 0.0
    %1460 = vmatprep.subr.mxu0 0.0
    %1461 = vmatpush1.xpose.msra.mxu0 0.0
    %1462 = vmatprep.subr.mxu0 0.0
    %1463 = vmatpush1.xpose.msra.mxu0 0.0
    %1464 = vmatprep.subr.mxu0 0.0
    %1465 = vmatpush1.xpose.msra.mxu0 0.0
    %1466 = vmatprep.subr.mxu0 0.0
    %1467 = vmatpush1.xpose.msra.mxu0 0.0
    %1468 = vmatprep.subr.mxu0 0.0
    %1469 = vmatpush1.xpose.msra.mxu0 0.0
    %1470 = vmatprep.mubr.f32.mxu0 0.0
    %1471 = vmatmul.mubr.f32.gmra.mrb[0].mxu0 %v1401
    %v1472 = vpop.f32.mrb[0].mxu0
    %v1473 = vadd.f32 %v1398, %v1472
    %v1474 = vpop.f32.mrb[0].mxu0
    %1475 = vdwg.mxu0
    %v1476 = vxor.u32 %v1473, 2147483648
    %v1477 = vmul.f32 %v1476, 1.442695
    %v1478 = vpow.pop %v1477
    %v1479 = vadd.f32 %v1478, 1.0
    %v1480 = vrcp.pop %v1479
    %v1481 = vmul.f32 1.0, %v1480
    %vm1482 = vcmask 57344
    %1483 = vst.msk [vmem:[%s6] sm:$0x1] %vm1482, %v1481
    // Predicated region
    $region30: #{cdr3b_bilstm_forward.1} parent=1 // pred_check
      _
    $region31: #{cdr3b_bilstm_forward.1} parent=1 // pred_check_branch
      %1485 = sbr.rel (0) target = $region33
    $region32: #{cdr3b_bilstm_forward.1} parent=1 // pred_region
      _
    $region33: #{cdr3b_bilstm_forward.1} parent=1 // pred_fallthru
      _
    // Predicated region
    $region34: #{cdr3b_bilstm_forward.1} parent=1 // pred_check
      _
    $region35: #{cdr3b_bilstm_forward.1} parent=1 // pred_check_branch
      %1487 = sbr.rel (0) target = $region37
    $region36: #{cdr3b_bilstm_forward.1} parent=1 // pred_region
      _
    $region37: #{cdr3b_bilstm_forward.1} parent=1 // pred_fallthru
      _
    %1488 = vsyncpa [#allocation4], 1

</llo_original>
